<compile_context>
chip_gen: v7x
topology: tpu7x:2x2x1
jax: 0.10.0
libtpu: 0.0.40
codegen_flags: <defaults>
</compile_context>

<pallas_src>
import functools

import jax
import jax.numpy as jnp
from jax.experimental import pallas as pl
from jax.experimental.pallas import tpu as pltpu


# ----------------------------- config helpers -------------------------------
def _make_divisible(v, divisor=8, min_value=None):
    if min_value is None:
        min_value = divisor
    new_v = max(min_value, int(v + divisor / 2) // divisor * divisor)
    if new_v < 0.9 * v:
        new_v += divisor
    return new_v


IN_CH = _make_divisible(16 * 1.0)        # 16
EXP_CH = _make_divisible(32 * 1.0)       # 32
OUT_CH = _make_divisible(16 * 1.0)       # 16
KSIZE = 3
STRIDE = 1
DILATION = 1
SQZ_CH = _make_divisible(EXP_CH // 4)    # 8
USE_RES = (STRIDE == 1 and IN_CH == OUT_CH)
BN_EPS = 1e-3

NB = 4                                   # images per grid step -> Nb*Cexp = 128 lanes
PAD = (KSIZE // 2) * DILATION            # 1
LANES = NB * EXP_CH                      # 128

# rows inside the packed (9+5, 128) parameter array
ROW_B_EXP = KSIZE * KSIZE                # 9
ROW_B_DW = ROW_B_EXP + 1                 # 10
ROW_B_FC2 = ROW_B_EXP + 2                # 11
ROW_B_FC1 = ROW_B_EXP + 3                # 12
ROW_B_PROJ = ROW_B_EXP + 4               # 13
PACK_ROWS = ROW_B_PROJ + 1               # 14


def _hardswish(x):
    return x * (jnp.clip(x + 3.0, 0.0, 6.0) * (1.0 / 6.0))


def _hardsigmoid(x):
    return jnp.clip(x + 3.0, 0.0, 6.0) * (1.0 / 6.0)


# ----------------------- fused inverted-residual kernel ----------------------
def _fused_kernel(x_ref, pack_ref, wexp_ref, wfc1_ref, wfc2_ref, wproj_ref,
                  o_ref, xp_ref, *, H, W, K, pad, add_residual):
    f32 = jnp.float32
    HW = H * W
    Hp, Wp, L = xp_ref.shape                                   # (H+2p, W+2p, 128)

    # ---- expand 1x1 conv (BN scale folded into block-diag weights) + bias + HS ----
    # x block: (HW, NB*Cin) lane layout col = nb*Cin + ci.
    h = jnp.dot(x_ref[0], wexp_ref[...], preferred_element_type=f32)   # (HW, 128)
    h = _hardswish(h + pack_ref[ROW_B_EXP])                            # (128,) bcast

    # ---- padded scratch: zero ONLY the halo frame (interior fully overwritten) ----
    zrow = jnp.zeros((pad, Wp, L), f32)
    xp_ref[0:pad, :, :] = zrow
    xp_ref[Hp - pad:Hp, :, :] = zrow
    zcol = jnp.zeros((H, pad, L), f32)
    xp_ref[pad:pad + H, 0:pad, :] = zcol
    xp_ref[pad:pad + H, Wp - pad:Wp, :] = zcol
    xp_ref[pad:pad + H, pad:pad + W, :] = h.reshape(H, W, L)   # free reshape

    # ---- depthwise 3x3 conv (scale folded into taps) + bias + Hardswish ----
    w_dw = pack_ref[0:K * K]                                   # (9, 128)
    acc = None
    for kw in range(K):                    # hoist W-shift: 3 shifted loads, not 9
        xw = xp_ref[:, kw:kw + W, :]                           # (Hp, W, 128)
        for kh in range(K):
            term = xw[kh:kh + H] * w_dw[kh * K + kw]
            acc = term if acc is None else acc + term          # first tap inits acc
    h = _hardswish(acc + pack_ref[ROW_B_DW])                   # (H, W, 128)
    h2 = h.reshape(HW, L)                                      # free reshape

    # ---- squeeze-excite: per-(image,channel) pool, block-diag tiny FCs, gate ----
    pooled = jnp.sum(h2, axis=0, keepdims=True) * (1.0 / HW)   # (1, 128)
    t = jnp.dot(pooled, wfc1_ref[...], preferred_element_type=f32)     # (1, NB*Csq)
    t = jnp.maximum(t + pack_ref[ROW_B_FC1, 0:t.shape[1]], 0.0)
    se = jnp.dot(t, wfc2_ref[...], preferred_element_type=f32)         # (1, 128)
    se = _hardsigmoid(se + pack_ref[ROW_B_FC2])
    h2 = h2 * se                                               # lane-dense gate

    # ---- project 1x1 conv (scale folded) + bias + residual ----
    o = jnp.dot(h2, wproj_ref[...], preferred_element_type=f32)        # (HW, NB*Cout)
    o = o + pack_ref[ROW_B_PROJ, 0:o.shape[1]]
    if add_residual:
        o = o + x_ref[0]                   # Cin == Cout -> same lane layout
    o_ref[0] = o.astype(o_ref.dtype)


# ------------------------------ full forward ---------------------------------
@jax.jit
def inverted_residual_forward(x_nchw, p):
    """x_nchw: (N, IN_CH, H, W) float32 -> (N, OUT_CH, H, W)."""
    f32 = jnp.float32
    N, C, H, W = x_nchw.shape
    HW = H * W

    # pad batch to a multiple of NB (demo uses N=8, so this is a no-op)
    pad_n = (-N) % NB
    if pad_n:
        x_nchw = jnp.pad(x_nchw, ((0, pad_n), (0, 0), (0, 0), (0, 0)))
    Np = N + pad_n
    G = Np // NB

    # lane-dense batched layout: (G, HW, NB*Cin), column index = nb*Cin + ci
    xr = (x_nchw.reshape(G, NB, C, H, W)
                .transpose(0, 3, 4, 1, 2)
                .reshape(G, HW, NB * C))

    # ---- fold BN scales into weights, build block-diagonal (per-image) weights ----
    eye = jnp.eye(NB, dtype=f32)
    w_exp_big = jnp.kron(eye, p["w_exp"] * p["s_exp"][None, :])    # (NB*Cin, 128)
    w_proj_big = jnp.kron(eye, p["w_proj"] * p["s_proj"][None, :])  # (128, NB*Cout)
    w_fc1_big = jnp.kron(eye, p["w_fc1"])                           # (128, NB*Csq)
    w_fc2_big = jnp.kron(eye, p["w_fc2"])                           # (NB*Csq, 128)

    dw = (p["w_dw"] * p["s_dw"]).reshape(KSIZE * KSIZE, EXP_CH)
    dw_big = jnp.tile(dw, (1, NB))                                  # (9, 128)

    def tile_nb(v):
        return jnp.tile(v, NB)

    def pad_lanes(v):
        return jnp.pad(v, (0, LANES - v.shape[0]))

    pack = jnp.concatenate([
        dw_big,                                    # rows 0..8  depthwise taps
        tile_nb(p["b_exp"])[None],                 # row 9      expand bias
        tile_nb(p["b_dw"])[None],                  # row 10     depthwise bias
        tile_nb(p["b_fc2"])[None],                 # row 11     SE fc2 bias
        pad_lanes(tile_nb(p["b_fc1"]))[None],      # row 12     SE fc1 bias
        pad_lanes(tile_nb(p["b_proj"]))[None],     # row 13     project bias
    ], axis=0).astype(f32)                         # (14, 128)

    kernel = functools.partial(_fused_kernel, H=H, W=W, K=KSIZE, pad=PAD,
                               add_residual=USE_RES)

    flops = int(G * (2 * HW * (NB * C) * LANES            # expand matmul
                     + 2 * HW * LANES * (NB * OUT_CH)     # project matmul
                     + (2 * KSIZE * KSIZE + 12) * HW * LANES))   # dw + elementwise
    bytes_acc = int(4 * (xr.size + G * HW * NB * OUT_CH + pack.size
                         + w_exp_big.size + w_proj_big.size
                         + w_fc1_big.size + w_fc2_big.size))

    out = pl.pallas_call(
        kernel,
        out_shape=jax.ShapeDtypeStruct((G, HW, NB * OUT_CH), x_nchw.dtype),
        grid_spec=pltpu.PrefetchScalarGridSpec(
            num_scalar_prefetch=0,
            grid=(G,),
            in_specs=[
                pl.BlockSpec((1, HW, NB * C), lambda g: (g, 0, 0)),       # x
                pl.BlockSpec((PACK_ROWS, LANES), lambda g: (0, 0)),       # pack
                pl.BlockSpec((NB * C, LANES), lambda g: (0, 0)),          # w_exp_big
                pl.BlockSpec((LANES, NB * SQZ_CH), lambda g: (0, 0)),     # w_fc1_big
                pl.BlockSpec((NB * SQZ_CH, LANES), lambda g: (0, 0)),     # w_fc2_big
                pl.BlockSpec((LANES, NB * OUT_CH), lambda g: (0, 0)),     # w_proj_big
            ],
            out_specs=pl.BlockSpec((1, HW, NB * OUT_CH), lambda g: (g, 0, 0)),
            # NOTE: for large LRASPP resolutions re-derive this vs the 64 MiB v7x
            # VMEM budget (scratch = (H+2)(W+2)*128*4 B) and tile spatially if needed.
            scratch_shapes=[pltpu.VMEM((H + 2 * PAD, W + 2 * PAD, LANES), f32)],
        ),
        compiler_params=pltpu.CompilerParams(
            dimension_semantics=("parallel",)),
        cost_estimate=pl.CostEstimate(flops=flops, transcendentals=0,
                                      bytes_accessed=bytes_acc),
    )(xr, pack, w_exp_big, w_fc1_big, w_fc2_big, w_proj_big)

    # (G, HW, NB*Cout) -> (N, Cout, H, W)
    y = (out.reshape(G, H, W, NB, OUT_CH)
            .transpose(0, 3, 4, 1, 2)
            .reshape(Np, OUT_CH, H, W))
    return y[:N] if pad_n else y


# -------------------------- pure-JAX reference -------------------------------
def reference_forward(x_nchw, p):
    N, C, H, W = x_nchw.shape
    x = jnp.transpose(x_nchw, (0, 2, 3, 1))
    h = _hardswish(jnp.einsum("nhwc,cd->nhwd", x, p["w_exp"]) * p["s_exp"] + p["b_exp"])
    hp = jnp.pad(h, ((0, 0), (1, 1), (1, 1), (0, 0)))
    acc = jnp.zeros_like(h)
    for kh in range(KSIZE):
        for kw in range(KSIZE):
            acc = acc + hp[:, kh:kh + H, kw:kw + W, :] * p["w_dw"][kh, kw, :]
    h = _hardswish(acc * p["s_dw"] + p["b_dw"])
    pooled = jnp.mean(h, axis=(1, 2))                               # (N, EXP_CH)
    s = jnp.maximum(pooled @ p["w_fc1"] + p["b_fc1"], 0.0)
    s = _hardsigmoid(s @ p["w_fc2"] + p["b_fc2"])
    h = h * s[:, None, None, :]
    out = jnp.einsum("nhwc,cd->nhwd", h, p["w_proj"]) * p["s_proj"] + p["b_proj"]
    if USE_RES:
        out = out + x
    return jnp.transpose(out, (0, 3, 1, 2))


# ------------------------------ parameter init -------------------------------
def _fold_bn(gamma, beta, mean, var, eps=BN_EPS):
    scale = gamma / jnp.sqrt(var + eps)
    return scale, beta - mean * scale


def make_params(key):
    ks = jax.random.split(key, 20)
    f32 = jnp.float32

    def bn(k, c):
        k1, k2, k3, k4 = jax.random.split(k, 4)
        gamma = 1.0 + 0.1 * jax.random.normal(k1, (c,), f32)
        beta = 0.1 * jax.random.normal(k2, (c,), f32)
        mean = 0.1 * jax.random.normal(k3, (c,), f32)
        var = jax.random.uniform(k4, (c,), f32, 0.5, 1.5)
        return _fold_bn(gamma, beta, mean, var)

    s_exp, b_exp = bn(ks[1], EXP_CH)
    s_dw, b_dw = bn(ks[3], EXP_CH)
    s_proj, b_proj = bn(ks[5], OUT_CH)
    return {
        "w_exp": 0.1 * jax.random.normal(ks[0], (IN_CH, EXP_CH), f32),
        "s_exp": s_exp, "b_exp": b_exp,
        "w_dw": 0.1 * jax.random.normal(ks[2], (KSIZE, KSIZE, EXP_CH), f32),
        "s_dw": s_dw, "b_dw": b_dw,
        "w_fc1": 0.1 * jax.random.normal(ks[6], (EXP_CH, SQZ_CH), f32),
        "b_fc1": 0.1 * jax.random.normal(ks[7], (SQZ_CH,), f32),
        "w_fc2": 0.1 * jax.random.normal(ks[8], (SQZ_CH, EXP_CH), f32),
        "b_fc2": 0.1 * jax.random.normal(ks[9], (EXP_CH,), f32),
        "w_proj": 0.1 * jax.random.normal(ks[4], (EXP_CH, OUT_CH), f32),
        "s_proj": s_proj, "b_proj": b_proj,
    }


# ----------------------------------- main ------------------------------------
if __name__ == "__main__":
    key = jax.random.PRNGKey(0)
    k_x, k_p = jax.random.split(key)
    # N=8 -> 2 grid steps of NB=4 images each (keeps both v7x TensorCores busy).
    N, H, W = 8, 16, 16
    x = jax.random.normal(k_x, (N, IN_CH, H, W), jnp.float32)   # PyTorch NCHW
    params = make_params(k_p)

    out = jax.block_until_ready(inverted_residual_forward(x, params))
    ref = jax.block_until_ready(reference_forward(x, params))

    assert out.shape == (N, OUT_CH, H, W), out.shape
    assert bool(jnp.allclose(out, ref, rtol=1e-2, atol=1e-2)), (
        float(jnp.max(jnp.abs(out - ref))))
    print("KERNEL_OK")
</pallas_src>

<mosaic_0001>
module attributes {stable_mosaic.version = 11 : i64} {
  func.func @_fused_kernel(%arg0: i32, %arg1: memref<1x256x64xf32, #tpu.memory_space<vmem>>, %arg2: memref<14x128xf32, #tpu.memory_space<vmem>>, %arg3: memref<64x128xf32, #tpu.memory_space<vmem>>, %arg4: memref<128x32xf32, #tpu.memory_space<vmem>>, %arg5: memref<32x128xf32, #tpu.memory_space<vmem>>, %arg6: memref<128x64xf32, #tpu.memory_space<vmem>>, %arg7: memref<1x256x64xf32, #tpu.memory_space<vmem>>, %arg8: memref<18x18x128xf32, #tpu.memory_space<vmem>>) attributes {dimension_semantics = [#tpu.dimension_semantics<parallel>], iteration_bounds = array<i64: 2>, scalar_prefetch = 0 : i64, scratch_operands = 1 : i64, tpu.core_type = #tpu.core_type<tc>, window_params = [{transform_indices = @transform_0, window_bounds = array<i64: 1, 256, 64>}, {pipeline_mode = #tpu.pipeline_mode<synchronous>, transform_indices = @transform_1, window_bounds = array<i64: 14, 128>}, {pipeline_mode = #tpu.pipeline_mode<synchronous>, transform_indices = @transform_2, window_bounds = array<i64: 64, 128>}, {pipeline_mode = #tpu.pipeline_mode<synchronous>, transform_indices = @transform_3, window_bounds = array<i64: 128, 32>}, {pipeline_mode = #tpu.pipeline_mode<synchronous>, transform_indices = @transform_4, window_bounds = array<i64: 32, 128>}, {pipeline_mode = #tpu.pipeline_mode<synchronous>, transform_indices = @transform_5, window_bounds = array<i64: 128, 64>}, {transform_indices = @transform_6, window_bounds = array<i64: 1, 256, 64>}]} {
    %c0 = arith.constant 0 : index
    %c0_0 = arith.constant 0 : index
    %c0_1 = arith.constant 0 : index
    %0 = vector.load %arg1[%c0, %c0_0, %c0_1] : memref<1x256x64xf32, #tpu.memory_space<vmem>>, vector<1x256x64xf32>
    %1 = vector.shape_cast %0 : vector<1x256x64xf32> to vector<256x64xf32>
    %c0_2 = arith.constant 0 : index
    %c0_3 = arith.constant 0 : index
    %2 = vector.load %arg3[%c0_2, %c0_3] : memref<64x128xf32, #tpu.memory_space<vmem>>, vector<64x128xf32>
    %cst = arith.constant dense<0.000000e+00> : vector<256x128xf32>
    %3 = tpu.matmul %1, %2, %cst {dimension_numbers = #tpu.dot_dimension_numbers<[1], [0], [0], [1], [0, 0, 1, 1], [], []>} : vector<256x64xf32>, vector<64x128xf32>, vector<256x128xf32> -> vector<256x128xf32>
    %c9 = arith.constant 9 : index
    %c0_4 = arith.constant 0 : index
    %4 = vector.load %arg2[%c9, %c0_4] : memref<14x128xf32, #tpu.memory_space<vmem>>, vector<1x128xf32>
    %5 = vector.shape_cast %4 : vector<1x128xf32> to vector<128xf32>
    %6 = vector.shape_cast %5 : vector<128xf32> to vector<1x128xf32>
    %7 = vector.broadcast %6 : vector<1x128xf32> to vector<256x128xf32>
    %8 = arith.addf %3, %7 : vector<256x128xf32>
    %cst_5 = arith.constant 3.000000e+00 : f32
    %9 = vector.broadcast %cst_5 : f32 to vector<256x128xf32>
    %10 = arith.addf %8, %9 : vector<256x128xf32>
    %cst_6 = arith.constant 0.000000e+00 : f32
    %cst_7 = arith.constant 6.000000e+00 : f32
    %11 = vector.broadcast %cst_6 : f32 to vector<256x128xf32>
    %12 = arith.maximumf %11, %10 : vector<256x128xf32>
    %13 = vector.broadcast %cst_7 : f32 to vector<256x128xf32>
    %14 = arith.minimumf %13, %12 : vector<256x128xf32>
    %cst_8 = arith.constant 0.166666672 : f32
    %15 = vector.broadcast %cst_8 : f32 to vector<256x128xf32>
    %16 = arith.mulf %14, %15 : vector<256x128xf32>
    %17 = arith.mulf %8, %16 : vector<256x128xf32>
    %cst_9 = arith.constant 0.000000e+00 : f32
    %18 = vector.broadcast %cst_9 : f32 to vector<1x18x128xf32>
    %c0_10 = arith.constant 0 : index
    %c0_11 = arith.constant 0 : index
    %c0_12 = arith.constant 0 : index
    %19 = vector.load %arg8[%c0_10, %c0_11, %c0_12] : memref<18x18x128xf32, #tpu.memory_space<vmem>>, vector<1x18x128xf32>
    tpu.vector_store %arg8[%c0_10, %c0_11, %c0_12], %18 {strides = array<i32>} : memref<18x18x128xf32, #tpu.memory_space<vmem>>, vector<1x18x128xf32>,
    %c17 = arith.constant 17 : index
    %c0_13 = arith.constant 0 : index
    %c0_14 = arith.constant 0 : index
    %20 = vector.load %arg8[%c17, %c0_13, %c0_14] : memref<18x18x128xf32, #tpu.memory_space<vmem>>, vector<1x18x128xf32>
    tpu.vector_store %arg8[%c17, %c0_13, %c0_14], %18 {strides = array<i32>} : memref<18x18x128xf32, #tpu.memory_space<vmem>>, vector<1x18x128xf32>,
    %cst_15 = arith.constant 0.000000e+00 : f32
    %21 = vector.broadcast %cst_15 : f32 to vector<16x1x128xf32>
    %c1 = arith.constant 1 : index
    %c0_16 = arith.constant 0 : index
    %c0_17 = arith.constant 0 : index
    %22 = vector.load %arg8[%c1, %c0_16, %c0_17] : memref<18x18x128xf32, #tpu.memory_space<vmem>>, vector<16x1x128xf32>
    tpu.vector_store %arg8[%c1, %c0_16, %c0_17], %21 {strides = array<i32>} : memref<18x18x128xf32, #tpu.memory_space<vmem>>, vector<16x1x128xf32>,
    %c1_18 = arith.constant 1 : index
    %c17_19 = arith.constant 17 : index
    %c0_20 = arith.constant 0 : index
    %23 = vector.load %arg8[%c1_18, %c17_19, %c0_20] : memref<18x18x128xf32, #tpu.memory_space<vmem>>, vector<16x1x128xf32>
    tpu.vector_store %arg8[%c1_18, %c17_19, %c0_20], %21 {strides = array<i32>} : memref<18x18x128xf32, #tpu.memory_space<vmem>>, vector<16x1x128xf32>,
    %24 = vector.shape_cast %17 : vector<256x128xf32> to vector<16x16x128xf32>
    %c1_21 = arith.constant 1 : index
    %c1_22 = arith.constant 1 : index
    %c0_23 = arith.constant 0 : index
    %25 = vector.load %arg8[%c1_21, %c1_22, %c0_23] : memref<18x18x128xf32, #tpu.memory_space<vmem>>, vector<16x16x128xf32>
    tpu.vector_store %arg8[%c1_21, %c1_22, %c0_23], %24 {strides = array<i32>} : memref<18x18x128xf32, #tpu.memory_space<vmem>>, vector<16x16x128xf32>,
    %c0_24 = arith.constant 0 : index
    %c0_25 = arith.constant 0 : index
    %26 = vector.load %arg2[%c0_24, %c0_25] : memref<14x128xf32, #tpu.memory_space<vmem>>, vector<9x128xf32>
    %c0_26 = arith.constant 0 : index
    %c0_27 = arith.constant 0 : index
    %c0_28 = arith.constant 0 : index
    %27 = vector.load %arg8[%c0_26, %c0_27, %c0_28] : memref<18x18x128xf32, #tpu.memory_space<vmem>>, vector<18x16x128xf32>
    %28 = vector.extract_strided_slice %27 {offsets = [0, 0, 0], sizes = [16, 16, 128], strides = [1, 1, 1]} : vector<18x16x128xf32> to vector<16x16x128xf32>
    %29 = vector.extract_strided_slice %26 {offsets = [0, 0], sizes = [1, 128], strides = [1, 1]} : vector<9x128xf32> to vector<1x128xf32>
    %30 = vector.shape_cast %29 : vector<1x128xf32> to vector<128xf32>
    %31 = vector.shape_cast %30 : vector<128xf32> to vector<1x1x128xf32>
    %32 = vector.broadcast %31 : vector<1x1x128xf32> to vector<16x16x128xf32>
    %33 = arith.mulf %28, %32 : vector<16x16x128xf32>
    %34 = vector.extract_strided_slice %27 {offsets = [1, 0, 0], sizes = [16, 16, 128], strides = [1, 1, 1]} : vector<18x16x128xf32> to vector<16x16x128xf32>
    %35 = vector.extract_strided_slice %26 {offsets = [3, 0], sizes = [1, 128], strides = [1, 1]} : vector<9x128xf32> to vector<1x128xf32>
    %36 = vector.shape_cast %35 : vector<1x128xf32> to vector<128xf32>
    %37 = vector.shape_cast %36 : vector<128xf32> to vector<1x1x128xf32>
    %38 = vector.broadcast %37 : vector<1x1x128xf32> to vector<16x16x128xf32>
    %39 = arith.mulf %34, %38 : vector<16x16x128xf32>
    %40 = arith.addf %33, %39 : vector<16x16x128xf32>
    %41 = vector.extract_strided_slice %27 {offsets = [2, 0, 0], sizes = [16, 16, 128], strides = [1, 1, 1]} : vector<18x16x128xf32> to vector<16x16x128xf32>
    %42 = vector.extract_strided_slice %26 {offsets = [6, 0], sizes = [1, 128], strides = [1, 1]} : vector<9x128xf32> to vector<1x128xf32>
    %43 = vector.shape_cast %42 : vector<1x128xf32> to vector<128xf32>
    %44 = vector.shape_cast %43 : vector<128xf32> to vector<1x1x128xf32>
    %45 = vector.broadcast %44 : vector<1x1x128xf32> to vector<16x16x128xf32>
    %46 = arith.mulf %41, %45 : vector<16x16x128xf32>
    %47 = arith.addf %40, %46 : vector<16x16x128xf32>
    %c0_29 = arith.constant 0 : index
    %c1_30 = arith.constant 1 : index
    %c0_31 = arith.constant 0 : index
    %48 = vector.load %arg8[%c0_29, %c1_30, %c0_31] : memref<18x18x128xf32, #tpu.memory_space<vmem>>, vector<18x16x128xf32>
    %49 = vector.extract_strided_slice %48 {offsets = [0, 0, 0], sizes = [16, 16, 128], strides = [1, 1, 1]} : vector<18x16x128xf32> to vector<16x16x128xf32>
    %50 = vector.extract_strided_slice %26 {offsets = [1, 0], sizes = [1, 128], strides = [1, 1]} : vector<9x128xf32> to vector<1x128xf32>
    %51 = vector.shape_cast %50 : vector<1x128xf32> to vector<128xf32>
    %52 = vector.shape_cast %51 : vector<128xf32> to vector<1x1x128xf32>
    %53 = vector.broadcast %52 : vector<1x1x128xf32> to vector<16x16x128xf32>
    %54 = arith.mulf %49, %53 : vector<16x16x128xf32>
    %55 = arith.addf %47, %54 : vector<16x16x128xf32>
    %56 = vector.extract_strided_slice %48 {offsets = [1, 0, 0], sizes = [16, 16, 128], strides = [1, 1, 1]} : vector<18x16x128xf32> to vector<16x16x128xf32>
    %57 = vector.extract_strided_slice %26 {offsets = [4, 0], sizes = [1, 128], strides = [1, 1]} : vector<9x128xf32> to vector<1x128xf32>
    %58 = vector.shape_cast %57 : vector<1x128xf32> to vector<128xf32>
    %59 = vector.shape_cast %58 : vector<128xf32> to vector<1x1x128xf32>
    %60 = vector.broadcast %59 : vector<1x1x128xf32> to vector<16x16x128xf32>
    %61 = arith.mulf %56, %60 : vector<16x16x128xf32>
    %62 = arith.addf %55, %61 : vector<16x16x128xf32>
    %63 = vector.extract_strided_slice %48 {offsets = [2, 0, 0], sizes = [16, 16, 128], strides = [1, 1, 1]} : vector<18x16x128xf32> to vector<16x16x128xf32>
    %64 = vector.extract_strided_slice %26 {offsets = [7, 0], sizes = [1, 128], strides = [1, 1]} : vector<9x128xf32> to vector<1x128xf32>
    %65 = vector.shape_cast %64 : vector<1x128xf32> to vector<128xf32>
    %66 = vector.shape_cast %65 : vector<128xf32> to vector<1x1x128xf32>
    %67 = vector.broadcast %66 : vector<1x1x128xf32> to vector<16x16x128xf32>
    %68 = arith.mulf %63, %67 : vector<16x16x128xf32>
    %69 = arith.addf %62, %68 : vector<16x16x128xf32>
    %c0_32 = arith.constant 0 : index
    %c2 = arith.constant 2 : index
    %c0_33 = arith.constant 0 : index
    %70 = vector.load %arg8[%c0_32, %c2, %c0_33] : memref<18x18x128xf32, #tpu.memory_space<vmem>>, vector<18x16x128xf32>
    %71 = vector.extract_strided_slice %70 {offsets = [0, 0, 0], sizes = [16, 16, 128], strides = [1, 1, 1]} : vector<18x16x128xf32> to vector<16x16x128xf32>
    %72 = vector.extract_strided_slice %26 {offsets = [2, 0], sizes = [1, 128], strides = [1, 1]} : vector<9x128xf32> to vector<1x128xf32>
    %73 = vector.shape_cast %72 : vector<1x128xf32> to vector<128xf32>
    %74 = vector.shape_cast %73 : vector<128xf32> to vector<1x1x128xf32>
    %75 = vector.broadcast %74 : vector<1x1x128xf32> to vector<16x16x128xf32>
    %76 = arith.mulf %71, %75 : vector<16x16x128xf32>
    %77 = arith.addf %69, %76 : vector<16x16x128xf32>
    %78 = vector.extract_strided_slice %70 {offsets = [1, 0, 0], sizes = [16, 16, 128], strides = [1, 1, 1]} : vector<18x16x128xf32> to vector<16x16x128xf32>
    %79 = vector.extract_strided_slice %26 {offsets = [5, 0], sizes = [1, 128], strides = [1, 1]} : vector<9x128xf32> to vector<1x128xf32>
    %80 = vector.shape_cast %79 : vector<1x128xf32> to vector<128xf32>
    %81 = vector.shape_cast %80 : vector<128xf32> to vector<1x1x128xf32>
    %82 = vector.broadcast %81 : vector<1x1x128xf32> to vector<16x16x128xf32>
    %83 = arith.mulf %78, %82 : vector<16x16x128xf32>
    %84 = arith.addf %77, %83 : vector<16x16x128xf32>
    %85 = vector.extract_strided_slice %70 {offsets = [2, 0, 0], sizes = [16, 16, 128], strides = [1, 1, 1]} : vector<18x16x128xf32> to vector<16x16x128xf32>
    %86 = vector.extract_strided_slice %26 {offsets = [8, 0], sizes = [1, 128], strides = [1, 1]} : vector<9x128xf32> to vector<1x128xf32>
    %87 = vector.shape_cast %86 : vector<1x128xf32> to vector<128xf32>
    %88 = vector.shape_cast %87 : vector<128xf32> to vector<1x1x128xf32>
    %89 = vector.broadcast %88 : vector<1x1x128xf32> to vector<16x16x128xf32>
    %90 = arith.mulf %85, %89 : vector<16x16x128xf32>
    %91 = arith.addf %84, %90 : vector<16x16x128xf32>
    %c10 = arith.constant 10 : index
    %c0_34 = arith.constant 0 : index
    %92 = vector.load %arg2[%c10, %c0_34] : memref<14x128xf32, #tpu.memory_space<vmem>>, vector<1x128xf32>
    %93 = vector.shape_cast %92 : vector<1x128xf32> to vector<128xf32>
    %94 = vector.shape_cast %93 : vector<128xf32> to vector<1x1x128xf32>
    %95 = vector.broadcast %94 : vector<1x1x128xf32> to vector<16x16x128xf32>
    %96 = arith.addf %91, %95 : vector<16x16x128xf32>
    %cst_35 = arith.constant 3.000000e+00 : f32
    %97 = vector.broadcast %cst_35 : f32 to vector<16x16x128xf32>
    %98 = arith.addf %96, %97 : vector<16x16x128xf32>
    %cst_36 = arith.constant 0.000000e+00 : f32
    %cst_37 = arith.constant 6.000000e+00 : f32
    %99 = vector.broadcast %cst_36 : f32 to vector<16x16x128xf32>
    %100 = arith.maximumf %99, %98 : vector<16x16x128xf32>
    %101 = vector.broadcast %cst_37 : f32 to vector<16x16x128xf32>
    %102 = arith.minimumf %101, %100 : vector<16x16x128xf32>
    %cst_38 = arith.constant 0.166666672 : f32
    %103 = vector.broadcast %cst_38 : f32 to vector<16x16x128xf32>
    %104 = arith.mulf %102, %103 : vector<16x16x128xf32>
    %105 = arith.mulf %96, %104 : vector<16x16x128xf32>
    %106 = vector.shape_cast %105 : vector<16x16x128xf32> to vector<256x128xf32>
    %cst_39 = arith.constant dense<0.000000e+00> : vector<128xf32>
    %107 = vector.multi_reduction <add>, %106, %cst_39 [0] : vector<256x128xf32> to vector<128xf32>
    %108 = vector.shape_cast %107 : vector<128xf32> to vector<1x128xf32>
    %cst_40 = arith.constant 3.906250e-03 : f32
    %109 = vector.broadcast %cst_40 : f32 to vector<1x128xf32>
    %110 = arith.mulf %108, %109 : vector<1x128xf32>
    %c0_41 = arith.constant 0 : index
    %c0_42 = arith.constant 0 : index
    %111 = vector.load %arg4[%c0_41, %c0_42] : memref<128x32xf32, #tpu.memory_space<vmem>>, vector<128x32xf32>
    %cst_43 = arith.constant dense<0.000000e+00> : vector<1x32xf32>
    %112 = tpu.matmul %110, %111, %cst_43 {dimension_numbers = #tpu.dot_dimension_numbers<[1], [0], [0], [1], [0, 0, 1, 1], [], []>} : vector<1x128xf32>, vector<128x32xf32>, vector<1x32xf32> -> vector<1x32xf32>
    %c12 = arith.constant 12 : index
    %c0_44 = arith.constant 0 : index
    %113 = vector.load %arg2[%c12, %c0_44] : memref<14x128xf32, #tpu.memory_space<vmem>>, vector<1x32xf32>
    %114 = vector.shape_cast %113 : vector<1x32xf32> to vector<32xf32>
    %115 = vector.shape_cast %114 : vector<32xf32> to vector<1x32xf32>
    %116 = arith.addf %112, %115 : vector<1x32xf32>
    %cst_45 = arith.constant 0.000000e+00 : f32
    %117 = vector.broadcast %cst_45 : f32 to vector<1x32xf32>
    %118 = arith.maximumf %116, %117 : vector<1x32xf32>
    %c0_46 = arith.constant 0 : index
    %c0_47 = arith.constant 0 : index
    %119 = vector.load %arg5[%c0_46, %c0_47] : memref<32x128xf32, #tpu.memory_space<vmem>>, vector<32x128xf32>
    %cst_48 = arith.constant dense<0.000000e+00> : vector<1x128xf32>
    %120 = tpu.matmul %118, %119, %cst_48 {dimension_numbers = #tpu.dot_dimension_numbers<[1], [0], [0], [1], [0, 0, 1, 1], [], []>} : vector<1x32xf32>, vector<32x128xf32>, vector<1x128xf32> -> vector<1x128xf32>
    %c11 = arith.constant 11 : index
    %c0_49 = arith.constant 0 : index
    %121 = vector.load %arg2[%c11, %c0_49] : memref<14x128xf32, #tpu.memory_space<vmem>>, vector<1x128xf32>
    %122 = vector.shape_cast %121 : vector<1x128xf32> to vector<128xf32>
    %123 = vector.shape_cast %122 : vector<128xf32> to vector<1x128xf32>
    %124 = arith.addf %120, %123 : vector<1x128xf32>
    %cst_50 = arith.constant 3.000000e+00 : f32
    %125 = vector.broadcast %cst_50 : f32 to vector<1x128xf32>
    %126 = arith.addf %124, %125 : vector<1x128xf32>
    %cst_51 = arith.constant 0.000000e+00 : f32
    %cst_52 = arith.constant 6.000000e+00 : f32
    %127 = vector.broadcast %cst_51 : f32 to vector<1x128xf32>
    %128 = arith.maximumf %127, %126 : vector<1x128xf32>
    %129 = vector.broadcast %cst_52 : f32 to vector<1x128xf32>
    %130 = arith.minimumf %129, %128 : vector<1x128xf32>
    %cst_53 = arith.constant 0.166666672 : f32
    %131 = vector.broadcast %cst_53 : f32 to vector<1x128xf32>
    %132 = arith.mulf %130, %131 : vector<1x128xf32>
    %133 = vector.broadcast %132 : vector<1x128xf32> to vector<256x128xf32>
    %134 = arith.mulf %106, %133 : vector<256x128xf32>
    %c0_54 = arith.constant 0 : index
    %c0_55 = arith.constant 0 : index
    %135 = vector.load %arg6[%c0_54, %c0_55] : memref<128x64xf32, #tpu.memory_space<vmem>>, vector<128x64xf32>
    %cst_56 = arith.constant dense<0.000000e+00> : vector<256x64xf32>
    %136 = tpu.matmul %134, %135, %cst_56 {dimension_numbers = #tpu.dot_dimension_numbers<[1], [0], [0], [1], [0, 0, 1, 1], [], []>} : vector<256x128xf32>, vector<128x64xf32>, vector<256x64xf32> -> vector<256x64xf32>
    %c13 = arith.constant 13 : index
    %c0_57 = arith.constant 0 : index
    %137 = vector.load %arg2[%c13, %c0_57] : memref<14x128xf32, #tpu.memory_space<vmem>>, vector<1x64xf32>
    %138 = vector.shape_cast %137 : vector<1x64xf32> to vector<64xf32>
    %139 = vector.shape_cast %138 : vector<64xf32> to vector<1x64xf32>
    %140 = vector.broadcast %139 : vector<1x64xf32> to vector<256x64xf32>
    %141 = arith.addf %136, %140 : vector<256x64xf32>
    %c0_58 = arith.constant 0 : index
    %c0_59 = arith.constant 0 : index
    %c0_60 = arith.constant 0 : index
    %142 = vector.load %arg1[%c0_58, %c0_59, %c0_60] : memref<1x256x64xf32, #tpu.memory_space<vmem>>, vector<1x256x64xf32>
    %143 = vector.shape_cast %142 : vector<1x256x64xf32> to vector<256x64xf32>
    %144 = arith.addf %141, %143 : vector<256x64xf32>
    %c0_61 = arith.constant 0 : index
    %c0_62 = arith.constant 0 : index
    %c0_63 = arith.constant 0 : index
    %145 = vector.load %arg7[%c0_61, %c0_62, %c0_63] : memref<1x256x64xf32, #tpu.memory_space<vmem>>, vector<1x256x64xf32>
    %146 = vector.shape_cast %145 : vector<1x256x64xf32> to vector<256x64xf32>
    %147 = vector.shape_cast %144 : vector<256x64xf32> to vector<1x256x64xf32>
    tpu.vector_store %arg7[%c0_61, %c0_62, %c0_63], %147 {strides = array<i32>} : memref<1x256x64xf32, #tpu.memory_space<vmem>>, vector<1x256x64xf32>,
    return
  }
  func.func @transform_0(%arg0: i32) -> (i32, i32, i32) {
    %c0_i32 = arith.constant 0 : i32
    %c0_i32_0 = arith.constant 0 : i32
    %c0_i32_1 = arith.constant 0 : i32
    return %arg0, %c0_i32, %c0_i32_0 : i32, i32, i32
  }
  func.func @transform_1(%arg0: i32) -> (i32, i32) {
    %c0_i32 = arith.constant 0 : i32
    %c0_i32_0 = arith.constant 0 : i32
    %c0_i32_1 = arith.constant 0 : i32
    return %c0_i32, %c0_i32_0 : i32, i32
  }
  func.func @transform_2(%arg0: i32) -> (i32, i32) {
    %c0_i32 = arith.constant 0 : i32
    %c0_i32_0 = arith.constant 0 : i32
    %c0_i32_1 = arith.constant 0 : i32
    return %c0_i32, %c0_i32_0 : i32, i32
  }
  func.func @transform_3(%arg0: i32) -> (i32, i32) {
    %c0_i32 = arith.constant 0 : i32
    %c0_i32_0 = arith.constant 0 : i32
    %c0_i32_1 = arith.constant 0 : i32
    return %c0_i32, %c0_i32_0 : i32, i32
  }
  func.func @transform_4(%arg0: i32) -> (i32, i32) {
    %c0_i32 = arith.constant 0 : i32
    %c0_i32_0 = arith.constant 0 : i32
    %c0_i32_1 = arith.constant 0 : i32
    return %c0_i32, %c0_i32_0 : i32, i32
  }
  func.func @transform_5(%arg0: i32) -> (i32, i32) {
    %c0_i32 = arith.constant 0 : i32
    %c0_i32_0 = arith.constant 0 : i32
    %c0_i32_1 = arith.constant 0 : i32
    return %c0_i32, %c0_i32_0 : i32, i32
  }
  func.func @transform_6(%arg0: i32) -> (i32, i32, i32) {
    %c0_i32 = arith.constant 0 : i32
    %c0_i32_0 = arith.constant 0 : i32
    %c0_i32_1 = arith.constant 0 : i32
    return %arg0, %c0_i32, %c0_i32_0 : i32, i32, i32
  }
}

</mosaic_0001>

<llo_original>
// kernel: tile.41
$region0: #{tile.41}
  #allocation2 [shape = 's32[1]{0}', space=sflag, size = 0x4, scoped, tag = 'scoped memory for tile.41']
  %s0 = inlined_call_operand.hbm [shape: f32[32], index: 0, kind: input, shape index: {}]
  %s1 = inlined_call_operand.vmem [shape: f32[4,32], index: 1, kind: output, shape index: {}]
  $region1: #{tile.41} parent=0
    #allocation0 [shape = 'u8[512]{0}', space=vmem, size = 0x400, scoped, tag = 'operand span for operand 0']
    #allocation1 [shape = 's32[1]{0}', space=sflag, size = 0x4, scoped, tag = 'scoped memory for tile.41']
    %2 = vsyncpa [#allocation1], 0
    // Predicated region
    $region2: #{tile.41} parent=1 // pred_check
      _
    $region3: #{tile.41} parent=1 // pred_check_branch
      %4 = sbr.rel (0) target = $region5
    $region4: #{tile.41} parent=1 // pred_region
      %s6 = ssub.s32 16, 16
      %7 = vsyncadd [#allocation1], %s6
      %s9 = sshll.u32 [#allocation0], 4
      %s10 = int_to_ptr.vmem [resolvable:$true] %s9
      %12 = dma.hbm_to_vmem [thread:$0]  %s0, 16, %s10, [#allocation1]
    $region5: #{tile.41} parent=1 // pred_fallthru
      _
    // Predicated region
    $region6: #{tile.41} parent=1 // pred_check
      _
    $region7: #{tile.41} parent=1 // pred_check_branch
      %14 = sbr.rel (0) target = $region9
    $region8: #{tile.41} parent=1 // pred_region
      %15 = dma.done [#allocation1], 16
    $region9: #{tile.41} parent=1 // pred_fallthru
      _
    %v16 = vld [vmem:[#allocation0] ss:$0 sm:$0xff]
    %17 = vst [vmem:[%s1] sm:$0xf] %v16
    %18 = vsyncpa [#allocation1], 1

// kernel: tile.42
$region0: #{tile.42}
  %s0 = inlined_call_operand.vmem [shape: f32[4,32], index: 0, kind: input, shape index: {}]
  %s1 = inlined_call_operand.vmem [shape: f32[1,128], index: 1, kind: output, shape index: {}]
  $region1: #{tile.42} parent=0
    #allocation0 [shape = 'u8[4096]{0}', space=vmem, size = 0x1000, scoped, tag = 'scoped mem for output reshape']
    #allocation1 [shape = 'u8[4096]{0}', space=vmem, size = 0x1000, scoped, tag = 'scoped mem for input reshape']
    %s3 = sshllo.u32 0, 4
    %v4 = vld [vmem:[%s0] sm:%s3]
    %5 = vst [vmem:[#allocation1] sm:%s3] %v4
    %v6 = vld [vmem:[#allocation1] sm:$0x1]
    %vm7 = vcmask 261120
    %8 = vst.msk [vmem:[#allocation0] sm:$0x1] %vm7, %v6
    %s9 = scalar_lea.vmem [#allocation1], 3
    %v10 = vld [vmem:[%s9] sm:$0x1]
    %11 = vrot.lane.b32.xlu0 %v10, 96
    %v12 = vpop.permute.xlu0 %11
    %vm13 = vcmask 1048320
    %14 = vst.msk [vmem:[#allocation0] sm:$0x1] %vm13, %v12
    %s15 = scalar_lea.vmem [#allocation1], 2
    %v16 = vld [vmem:[%s15] sm:$0x1]
    %17 = vrot.lane.b32.xlu0 %v16, 64
    %v18 = vpop.permute.xlu0 %17
    %vm19 = vcmask 785920
    %20 = vst.msk [vmem:[#allocation0] sm:$0x1] %vm19, %v18
    %s21 = scalar_lea.vmem [#allocation1], 1
    %v22 = vld [vmem:[%s21] sm:$0x1]
    %23 = vrot.lane.b32.xlu0 %v22, 32
    %v24 = vpop.permute.xlu0 %23
    %vm25 = vcmask 523520
    %26 = vst.msk [vmem:[#allocation0] sm:$0x1] %vm25, %v24
    %s28 = sshllo.u32 0, 1
    %v30 = vld [vmem:[#allocation0] sm:%s28]
    %s31 = sshllo.u32 0, 1
    %32 = vst [vmem:[%s1] sm:%s31] %v30

// kernel: tile.52
$region0: #{tile.52}
  %s0 = inlined_call_operand.vmem [shape: f32[4,8], index: 0, kind: input, shape index: {}]
  %s1 = inlined_call_operand.vmem [shape: f32[32], index: 1, kind: output, shape index: {}]
  $region1: #{tile.52} parent=0
    #allocation0 [shape = 'u8[4096]{0}', space=vmem, size = 0x1000, scoped, tag = 'scoped mem for output reshape']
    #allocation1 [shape = 'u8[4096]{0}', space=vmem, size = 0x1000, scoped, tag = 'scoped mem for input reshape']
    %s3 = sshllo.u32 0, 4
    %v4 = vld [vmem:[%s0] sm:%s3]
    %5 = vst [vmem:[#allocation1] sm:%s3] %v4
    %v6 = vld [vmem:[#allocation1] sm:$0x1]
    %vm7 = vcmask 64512
    %8 = vst.msk [vmem:[#allocation0] sm:$0x1] %vm7, %v6
    %s9 = scalar_lea.vmem [#allocation1], 3
    %v10 = vld [vmem:[%s9] sm:$0x1]
    %11 = vrot.lane.b32.xlu0 %v10, 24
    %v12 = vpop.permute.xlu0 %11
    %vm13 = vcmask 261312
    %14 = vst.msk [vmem:[#allocation0] sm:$0x1] %vm13, %v12
    %s15 = scalar_lea.vmem [#allocation1], 2
    %v16 = vld [vmem:[%s15] sm:$0x1]
    %17 = vrot.lane.b32.xlu0 %v16, 16
    %v18 = vpop.permute.xlu0 %17
    %vm19 = vcmask 195712
    %20 = vst.msk [vmem:[#allocation0] sm:$0x1] %vm19, %v18
    %s21 = scalar_lea.vmem [#allocation1], 1
    %v22 = vld [vmem:[%s21] sm:$0x1]
    %23 = vrot.lane.b32.xlu0 %v22, 8
    %v24 = vpop.permute.xlu0 %23
    %vm25 = vcmask 130112
    %26 = vst.msk [vmem:[#allocation0] sm:$0x1] %vm25, %v24
    %s28 = sshllo.u32 0, 1
    %v30 = vld [vmem:[#allocation0] sm:%s28]
    %s31 = sshllo.u32 0, 1
    %32 = vst [vmem:[%s1] sm:%s31] %v30

// kernel: tile.51
$region0: #{tile.51}
  #allocation0 [shape = 's32[1]{0}', space=sflag, size = 0x4, scoped, tag = 'scoped memory for tile.51']
  %s0 = inlined_call_operand.vmem [shape: f32[8], index: 0, kind: input, shape index: {}]
  %s1 = inlined_call_operand.vmem [shape: f32[4,8], index: 1, kind: output, shape index: {}]
  // Predicated region
  $region2: #{tile.51} parent=0 // pred_check
    _
  $region3: #{tile.51} parent=0 // pred_check_branch
    %3 = sbr.rel (0) target = $region5
  $region4: #{tile.51} parent=0 // pred_region
    _
  $region5: #{tile.51} parent=0 // pred_fallthru
    _
  %v4 = vld [vmem:[%s0] ss:$0 sm:$0xff]
  %5 = vst [vmem:[%s1] sm:$0xf] %v4

// kernel: tile.56
$region0: #{tile.56}
  #allocation0 [shape = 's32[1]{0}', space=sflag, size = 0x4, scoped, tag = 'scoped memory for tile.56']
  %s0 = inlined_call_operand.vmem [shape: f32[16], index: 0, kind: input, shape index: {}]
  %s1 = inlined_call_operand.vmem [shape: f32[4,16], index: 1, kind: output, shape index: {}]
  // Predicated region
  $region2: #{tile.56} parent=0 // pred_check
    _
  $region3: #{tile.56} parent=0 // pred_check_branch
    %3 = sbr.rel (0) target = $region5
  $region4: #{tile.56} parent=0 // pred_region
    _
  $region5: #{tile.56} parent=0 // pred_fallthru
    _
  %v4 = vld [vmem:[%s0] ss:$0 sm:$0xff]
  %5 = vst [vmem:[%s1] sm:$0xf] %v4

// kernel: tile.36
$region0: #{tile.36}
  #allocation0 [shape = 's32[1]{0}', space=sflag, size = 0x4, scoped, tag = 'scoped memory for tile.36']
  %s0 = inlined_call_operand.vmem [shape: f32[32], index: 0, kind: input, shape index: {}]
  %s1 = inlined_call_operand.vmem [shape: f32[4,32], index: 1, kind: output, shape index: {}]
  // Predicated region
  $region2: #{tile.36} parent=0 // pred_check
    _
  $region3: #{tile.36} parent=0 // pred_check_branch
    %3 = sbr.rel (0) target = $region5
  $region4: #{tile.36} parent=0 // pred_region
    _
  $region5: #{tile.36} parent=0 // pred_fallthru
    _
  %v4 = vld [vmem:[%s0] ss:$0 sm:$0xff]
  %5 = vst [vmem:[%s1] sm:$0xf] %v4

// kernel: tile.57
$region0: #{tile.57}
  %s0 = inlined_call_operand.vmem [shape: f32[4,16], index: 0, kind: input, shape index: {}]
  %s1 = inlined_call_operand.vmem [shape: f32[64], index: 1, kind: output, shape index: {}]
  $region1: #{tile.57} parent=0
    #allocation0 [shape = 'u8[4096]{0}', space=vmem, size = 0x1000, scoped, tag = 'scoped mem for output reshape']
    #allocation1 [shape = 'u8[4096]{0}', space=vmem, size = 0x1000, scoped, tag = 'scoped mem for input reshape']
    %s3 = sshllo.u32 0, 4
    %v4 = vld [vmem:[%s0] sm:%s3]
    %5 = vst [vmem:[#allocation1] sm:%s3] %v4
    %v6 = vld [vmem:[#allocation1] sm:$0x1]
    %vm7 = vcmask 130048
    %8 = vst.msk [vmem:[#allocation0] sm:$0x1] %vm7, %v6
    %s9 = scalar_lea.vmem [#allocation1], 3
    %v10 = vld [vmem:[%s9] sm:$0x1]
    %11 = vrot.lane.b32.xlu0 %v10, 48
    %v12 = vpop.permute.xlu0 %11
    %vm13 = vcmask 523648
    %14 = vst.msk [vmem:[#allocation0] sm:$0x1] %vm13, %v12
    %s15 = scalar_lea.vmem [#allocation1], 2
    %v16 = vld [vmem:[%s15] sm:$0x1]
    %17 = vrot.lane.b32.xlu0 %v16, 32
    %v18 = vpop.permute.xlu0 %17
    %vm19 = vcmask 392448
    %20 = vst.msk [vmem:[#allocation0] sm:$0x1] %vm19, %v18
    %s21 = scalar_lea.vmem [#allocation1], 1
    %v22 = vld [vmem:[%s21] sm:$0x1]
    %23 = vrot.lane.b32.xlu0 %v22, 16
    %v24 = vpop.permute.xlu0 %23
    %vm25 = vcmask 261248
    %26 = vst.msk [vmem:[#allocation0] sm:$0x1] %vm25, %v24
    %s28 = sshllo.u32 0, 1
    %v30 = vld [vmem:[#allocation0] sm:%s28]
    %s31 = sshllo.u32 0, 1
    %32 = vst [vmem:[%s1] sm:%s31] %v30

// kernel: tile.32
$region0: #{tile.32}
  %s0 = inlined_call_operand.vmem [shape: f32[9,4,32], index: 0, kind: input, shape index: {}]
  %s1 = inlined_call_operand.vmem [shape: f32[9,128], index: 1, kind: output, shape index: {}]
  $region1: #{tile.32} parent=0
    #allocation0 [shape = 'u8[36864]{0}', space=vmem, size = 0x9000, scoped, tag = 'scoped mem for input reshape']
    %s3 = sshllo.u32 0, 4
    %s4 = smul.addr 4, 8
    %s5 = scalar_lea.vmem %s0, %s4
    %v6 = vld [vmem:[%s5] sm:%s3]
    %s7 = scalar_lea.vmem [#allocation0], 64
    %8 = vst [vmem:[%s7] sm:%s3] %v6
    %s9 = smul.addr 4, 7
    %s10 = scalar_lea.vmem %s0, %s9
    %v11 = vld [vmem:[%s10] sm:%s3]
    %s12 = scalar_lea.vmem [#allocation0], 56
    %13 = vst [vmem:[%s12] sm:%s3] %v11
    %s14 = smul.addr 4, 6
    %s15 = scalar_lea.vmem %s0, %s14
    %v16 = vld [vmem:[%s15] sm:%s3]
    %s17 = scalar_lea.vmem [#allocation0], 48
    %18 = vst [vmem:[%s17] sm:%s3] %v16
    %s19 = smul.addr 4, 5
    %s20 = scalar_lea.vmem %s0, %s19
    %v21 = vld [vmem:[%s20] sm:%s3]
    %s22 = scalar_lea.vmem [#allocation0], 40
    %23 = vst [vmem:[%s22] sm:%s3] %v21
    %s24 = smul.addr 4, 4
    %s25 = scalar_lea.vmem %s0, %s24
    %v26 = vld [vmem:[%s25] sm:%s3]
    %s27 = scalar_lea.vmem [#allocation0], 32
    %28 = vst [vmem:[%s27] sm:%s3] %v26
    %s29 = smul.addr 4, 3
    %s30 = scalar_lea.vmem %s0, %s29
    %v31 = vld [vmem:[%s30] sm:%s3]
    %s32 = scalar_lea.vmem [#allocation0], 24
    %33 = vst [vmem:[%s32] sm:%s3] %v31
    %s34 = smul.addr 4, 2
    %s35 = scalar_lea.vmem %s0, %s34
    %v36 = vld [vmem:[%s35] sm:%s3]
    %s37 = scalar_lea.vmem [#allocation0], 16
    %38 = vst [vmem:[%s37] sm:%s3] %v36
    %s39 = scalar_lea.vmem %s0, 4
    %v40 = vld [vmem:[%s39] sm:%s3]
    %s41 = scalar_lea.vmem [#allocation0], 8
    %42 = vst [vmem:[%s41] sm:%s3] %v40
    %v43 = vld [vmem:[%s0] sm:%s3]
    %44 = vst [vmem:[#allocation0] sm:%s3] %v43
    %v45 = vld [vmem:[#allocation0] ss:$8 sm:$0xf]
    %v46 = vld [vmem:[#allocation0] ss:$8 sm:$0xf0]
    %vm47 = vcmask 1047556
    %v48 = vsel %vm47, %v46, %v45
    %vm49 = vcmask 261120
    %50 = vst.msk [vmem:[%s1] sm:$0xff] %vm49, %v48
    %s51 = scalar_lea.vmem [#allocation0], 64
    %v52 = vld [vmem:[%s51] sm:$0x1]
    %vm53 = vcmask 261120
    %s54 = scalar_lea.vmem %s1, 8
    %55 = vst.msk [vmem:[%s54] sm:$0x1] %vm53, %v52
    %s56 = scalar_lea.vmem [#allocation0], 3
    %v57 = vld [vmem:[%s56] ss:$8 sm:$0xf]
    %s58 = scalar_lea.vmem [#allocation0], 3
    %v59 = vld [vmem:[%s58] ss:$8 sm:$0xf0]
    %vm60 = vcmask 1047556
    %v61 = vsel %vm60, %v59, %v57
    %62 = vrot.lane.b32.xlu0 %v61, 96
    %v63 = vpop.permute.xlu0 %62
    %vm64 = vcmask 1048320
    %65 = vst.msk [vmem:[%s1] sm:$0xff] %vm64, %v63
    %s66 = scalar_lea.vmem [#allocation0], 67
    %v67 = vld [vmem:[%s66] sm:$0x1]
    %68 = vrot.lane.b32.xlu0 %v67, 96
    %v69 = vpop.permute.xlu0 %68
    %vm70 = vcmask 1048320
    %s71 = scalar_lea.vmem %s1, 8
    %72 = vst.msk [vmem:[%s71] sm:$0x1] %vm70, %v69
    %s73 = scalar_lea.vmem [#allocation0], 2
    %v74 = vld [vmem:[%s73] ss:$8 sm:$0xf]
    %s75 = scalar_lea.vmem [#allocation0], 2
    %v76 = vld [vmem:[%s75] ss:$8 sm:$0xf0]
    %vm77 = vcmask 1047556
    %v78 = vsel %vm77, %v76, %v74
    %79 = vrot.lane.b32.xlu0 %v78, 64
    %v80 = vpop.permute.xlu0 %79
    %vm81 = vcmask 785920
    %82 = vst.msk [vmem:[%s1] sm:$0xff] %vm81, %v80
    %s83 = scalar_lea.vmem [#allocation0], 66
    %v84 = vld [vmem:[%s83] sm:$0x1]
    %85 = vrot.lane.b32.xlu0 %v84, 64
    %v86 = vpop.permute.xlu0 %85
    %vm87 = vcmask 785920
    %s88 = scalar_lea.vmem %s1, 8
    %89 = vst.msk [vmem:[%s88] sm:$0x1] %vm87, %v86
    %s90 = scalar_lea.vmem [#allocation0], 1
    %v91 = vld [vmem:[%s90] ss:$8 sm:$0xf]
    %s92 = scalar_lea.vmem [#allocation0], 1
    %v93 = vld [vmem:[%s92] ss:$8 sm:$0xf0]
    %vm94 = vcmask 1047556
    %v95 = vsel %vm94, %v93, %v91
    %96 = vrot.lane.b32.xlu0 %v95, 32
    %v97 = vpop.permute.xlu0 %96
    %vm98 = vcmask 523520
    %99 = vst.msk [vmem:[%s1] sm:$0xff] %vm98, %v97
    %s100 = scalar_lea.vmem [#allocation0], 65
    %v101 = vld [vmem:[%s100] sm:$0x1]
    %102 = vrot.lane.b32.xlu0 %v101, 32
    %v103 = vpop.permute.xlu0 %102
    %vm104 = vcmask 523520
    %s105 = scalar_lea.vmem %s1, 8
    %106 = vst.msk [vmem:[%s105] sm:$0x1] %vm104, %v103

// kernel: inverted_residual_forward.1
$region0: #{inverted_residual_forward.1}
  #allocation0 [shape = 'u32[]', space=smem, size = 0x4, offset = 0x4, fixed_abs, tag = 'smem constant byte address 0x4 - core index']
  #allocation1 [shape = 'u32[144,128]{1,0:T(1,128)}', space=vmem, size = 0x12000, scoped, tag = 'internal scratch']
  #allocation2 [shape = 'f32[18,18,128]{2,1,0:T(8,128)}', space=vmem, size = 0x36000, scoped, tag = 'scratch operand']
  %s0 = inlined_call_operand.vmem [shape: f32[2,256,64], index: 0, kind: input, shape index: {}]
  %s1 = inlined_call_operand.vmem [shape: f32[14,128], index: 1, kind: input, shape index: {}]
  %s2 = inlined_call_operand.vmem [shape: f32[64,128], index: 2, kind: input, shape index: {}]
  %s3 = inlined_call_operand.vmem [shape: f32[128,32], index: 3, kind: input, shape index: {}]
  %s4 = inlined_call_operand.vmem [shape: f32[32,128], index: 4, kind: input, shape index: {}]
  %s5 = inlined_call_operand.vmem [shape: f32[128,64], index: 5, kind: input, shape index: {}]
  %s6 = inlined_call_operand.vmem [shape: f32[2,256,64], index: 6, kind: output, shape index: {}]
  %s7 = sld [smem:[#allocation0]]
  $region57: #{inverted_residual_forward.1} parent=0
    _
  %s9 = ssub.s32 1, %s7
  %s10 = scalar_select 0, %s9, %s7
  loop: start=0, step=1, limit=4
  $region2: #{inverted_residual_forward.1} parent=0 // loop_pre_header
    _
  $region3: #{inverted_residual_forward.1} parent=0 // loop_header
    %s12 = sphi 0, %s16
    %p13 = scmp.ge.s32.totalorder %s12, 4
    %s22 = sphi 0, %s24
    %s25 = sphi 0, %s22
    %s26 = sphi 0, %s25
    %s42 = sphi 0, %s26
    %s46 = sphi 0, %s46
    %s48 = sphi 0, %s46
    %s49 = sphi 0, %s48
    %s63 = sphi 0, %s49
    %s67 = sphi 0, %s67
    %s69 = sphi 0, %s67
    %s70 = sphi 0, %s69
    %s84 = sphi 0, %s70
    %s88 = sphi 0, %s88
    %s90 = sphi 0, %s88
    %s91 = sphi 0, %s90
    %s105 = sphi 0, %s91
    %s109 = sphi 0, %s109
    %s111 = sphi 0, %s109
    %s112 = sphi 0, %s111
    %s126 = sphi 0, %s112
    %s130 = sphi 0, %s130
    %s132 = sphi 0, %s130
    %s133 = sphi 0, %s132
    %s147 = sphi 0, %s133
    %s153 = sphi 0, %s155
    %s156 = sphi 0, %s153
    %s157 = sphi 0, %s156
    %s173 = sphi 0, %s157
  $region4: #{inverted_residual_forward.1} parent=0 // loop_header_branch
    %15 = sbr.rel (%p13) target = $region8
  $region5: #{inverted_residual_forward.1} parent=0 // loop_body
    %s17 = ssub.s32 %s12, 1
    %s18 = ssub.s32 %s12, 2
    %s19 = sadd.s32 %s12, 1
    %s20 = ssub.s32 %s12, %s19
    %p21 = scmp.eq.s32.totalorder %s20, 0
    %s23 = sadd.s32 %s22, 1
    %s24 = scalar_select %p21, %s22, %s23
    %p27 = pneg %p21
    %p28 = scmp.eq.s32.totalorder %s12, 1
    %p29 = por %p27, %p28
    %p30 = scmp.ne.s32.totalorder %s22, %s25
    %p31 = scmp.eq.s32.totalorder %s12, 0
    %p32 = por %p30, %p31
    %p33 = scmp.ne.s32.totalorder %s22, %s25
    %p34 = scmp.eq.s32.totalorder %s17, 1
    %p35 = por %p33, %p34
    %p36 = scmp.ne.s32.totalorder %s25, %s26
    %p37 = scmp.eq.s32.totalorder %s17, 0
    %p38 = por %p36, %p37
    %p39 = scmp.ne.s32.totalorder %s25, %s26
    %p40 = scmp.eq.s32.totalorder %s18, 1
    %p41 = por %p39, %p40
    %p43 = scmp.ne.s32.totalorder %s26, %s42
    %p44 = scmp.eq.s32.totalorder %s18, 0
    %p45 = por %p43, %p44
    %s47 = sadd.s32 %s46, 1
    %p50 = scmp.eq.s32.totalorder %s12, 1
    %p51 = scmp.ne.s32.totalorder %s46, %s48
    %p52 = scmp.eq.s32.totalorder %s12, 0
    %p53 = por %p51, %p52
    %p54 = scmp.ne.s32.totalorder %s46, %s48
    %p55 = scmp.eq.s32.totalorder %s17, 1
    %p56 = por %p54, %p55
    %p57 = scmp.ne.s32.totalorder %s48, %s49
    %p58 = scmp.eq.s32.totalorder %s17, 0
    %p59 = por %p57, %p58
    %p60 = scmp.ne.s32.totalorder %s48, %s49
    %p61 = scmp.eq.s32.totalorder %s18, 1
    %p62 = por %p60, %p61
    %p64 = scmp.ne.s32.totalorder %s49, %s63
    %p65 = scmp.eq.s32.totalorder %s18, 0
    %p66 = por %p64, %p65
    %s68 = sadd.s32 %s67, 1
    %p71 = scmp.eq.s32.totalorder %s12, 1
    %p72 = scmp.ne.s32.totalorder %s67, %s69
    %p73 = scmp.eq.s32.totalorder %s12, 0
    %p74 = por %p72, %p73
    %p75 = scmp.ne.s32.totalorder %s67, %s69
    %p76 = scmp.eq.s32.totalorder %s17, 1
    %p77 = por %p75, %p76
    %p78 = scmp.ne.s32.totalorder %s69, %s70
    %p79 = scmp.eq.s32.totalorder %s17, 0
    %p80 = por %p78, %p79
    %p81 = scmp.ne.s32.totalorder %s69, %s70
    %p82 = scmp.eq.s32.totalorder %s18, 1
    %p83 = por %p81, %p82
    %p85 = scmp.ne.s32.totalorder %s70, %s84
    %p86 = scmp.eq.s32.totalorder %s18, 0
    %p87 = por %p85, %p86
    %s89 = sadd.s32 %s88, 1
    %p92 = scmp.eq.s32.totalorder %s12, 1
    %p93 = scmp.ne.s32.totalorder %s88, %s90
    %p94 = scmp.eq.s32.totalorder %s12, 0
    %p95 = por %p93, %p94
    %p96 = scmp.ne.s32.totalorder %s88, %s90
    %p97 = scmp.eq.s32.totalorder %s17, 1
    %p98 = por %p96, %p97
    %p99 = scmp.ne.s32.totalorder %s90, %s91
    %p100 = scmp.eq.s32.totalorder %s17, 0
    %p101 = por %p99, %p100
    %p102 = scmp.ne.s32.totalorder %s90, %s91
    %p103 = scmp.eq.s32.totalorder %s18, 1
    %p104 = por %p102, %p103
    %p106 = scmp.ne.s32.totalorder %s91, %s105
    %p107 = scmp.eq.s32.totalorder %s18, 0
    %p108 = por %p106, %p107
    %s110 = sadd.s32 %s109, 1
    %p113 = scmp.eq.s32.totalorder %s12, 1
    %p114 = scmp.ne.s32.totalorder %s109, %s111
    %p115 = scmp.eq.s32.totalorder %s12, 0
    %p116 = por %p114, %p115
    %p117 = scmp.ne.s32.totalorder %s109, %s111
    %p118 = scmp.eq.s32.totalorder %s17, 1
    %p119 = por %p117, %p118
    %p120 = scmp.ne.s32.totalorder %s111, %s112
    %p121 = scmp.eq.s32.totalorder %s17, 0
    %p122 = por %p120, %p121
    %p123 = scmp.ne.s32.totalorder %s111, %s112
    %p124 = scmp.eq.s32.totalorder %s18, 1
    %p125 = por %p123, %p124
    %p127 = scmp.ne.s32.totalorder %s112, %s126
    %p128 = scmp.eq.s32.totalorder %s18, 0
    %p129 = por %p127, %p128
    %s131 = sadd.s32 %s130, 1
    %p134 = scmp.eq.s32.totalorder %s12, 1
    %p135 = scmp.ne.s32.totalorder %s130, %s132
    %p136 = scmp.eq.s32.totalorder %s12, 0
    %p137 = por %p135, %p136
    %p138 = scmp.ne.s32.totalorder %s130, %s132
    %p139 = scmp.eq.s32.totalorder %s17, 1
    %p140 = por %p138, %p139
    %p141 = scmp.ne.s32.totalorder %s132, %s133
    %p142 = scmp.eq.s32.totalorder %s17, 0
    %p143 = por %p141, %p142
    %p144 = scmp.ne.s32.totalorder %s132, %s133
    %p145 = scmp.eq.s32.totalorder %s18, 1
    %p146 = por %p144, %p145
    %p148 = scmp.ne.s32.totalorder %s133, %s147
    %p149 = scmp.eq.s32.totalorder %s18, 0
    %p150 = por %p148, %p149
    %s151 = ssub.s32 %s12, %s19
    %p152 = scmp.eq.s32.totalorder %s151, 0
    %s154 = sadd.s32 %s153, 1
    %s155 = scalar_select %p152, %s153, %s154
    %p158 = pneg %p152
    %p159 = scmp.eq.s32.totalorder %s12, 1
    %p160 = por %p158, %p159
    %p161 = scmp.ne.s32.totalorder %s153, %s156
    %p162 = scmp.eq.s32.totalorder %s12, 0
    %p163 = por %p161, %p162
    %p164 = scmp.ne.s32.totalorder %s153, %s156
    %p165 = scmp.eq.s32.totalorder %s17, 1
    %p166 = por %p164, %p165
    %p167 = scmp.ne.s32.totalorder %s156, %s157
    %p168 = scmp.eq.s32.totalorder %s17, 0
    %p169 = por %p167, %p168
    %p170 = scmp.ne.s32.totalorder %s156, %s157
    %p171 = scmp.eq.s32.totalorder %s18, 1
    %p172 = por %p170, %p171
    %p174 = scmp.ne.s32.totalorder %s157, %s173
    %p175 = scmp.eq.s32.totalorder %s18, 0
    %p176 = por %p174, %p175
    %p177 = scmp.le.s32.totalorder 1, %s12
    %p178 = scmp.lt.s32.totalorder %s12, 3
    %p179 = pnand %p177, %p178
    %p180 = pneg %p179
    // Predicated region
    $region9: #{inverted_residual_forward.1} parent=5 // pred_check
      _
    $region10: #{inverted_residual_forward.1} parent=5 // pred_check_branch
      %182 = sbr.rel (%p179) target = $region12
    $region11: #{inverted_residual_forward.1} parent=5 // pred_region
      %s183 = ssub.s32 %s12, 1
      // Predicated region
      $region13: #{inverted_residual_forward.1} parent=11 // pred_check
        %p184 = pneg %p59
      $region14: #{inverted_residual_forward.1} parent=11 // pred_check_branch
        %186 = sbr.rel (%p184) target = $region16
      $region15: #{inverted_residual_forward.1} parent=11 // pred_region
        _
      $region16: #{inverted_residual_forward.1} parent=11 // pred_fallthru
        _
      // Predicated region
      $region17: #{inverted_residual_forward.1} parent=11 // pred_check
        %p187 = pneg %p80
      $region18: #{inverted_residual_forward.1} parent=11 // pred_check_branch
        %189 = sbr.rel (%p187) target = $region20
      $region19: #{inverted_residual_forward.1} parent=11 // pred_region
        _
      $region20: #{inverted_residual_forward.1} parent=11 // pred_fallthru
        _
      // Predicated region
      $region21: #{inverted_residual_forward.1} parent=11 // pred_check
        %p190 = pneg %p101
      $region22: #{inverted_residual_forward.1} parent=11 // pred_check_branch
        %192 = sbr.rel (%p190) target = $region24
      $region23: #{inverted_residual_forward.1} parent=11 // pred_region
        _
      $region24: #{inverted_residual_forward.1} parent=11 // pred_fallthru
        _
      // Predicated region
      $region25: #{inverted_residual_forward.1} parent=11 // pred_check
        %p193 = pneg %p122
      $region26: #{inverted_residual_forward.1} parent=11 // pred_check_branch
        %195 = sbr.rel (%p193) target = $region28
      $region27: #{inverted_residual_forward.1} parent=11 // pred_region
        _
      $region28: #{inverted_residual_forward.1} parent=11 // pred_fallthru
        _
      // Predicated region
      $region29: #{inverted_residual_forward.1} parent=11 // pred_check
        %p196 = pneg %p143
      $region30: #{inverted_residual_forward.1} parent=11 // pred_check_branch
        %198 = sbr.rel (%p196) target = $region32
      $region31: #{inverted_residual_forward.1} parent=11 // pred_region
        _
      $region32: #{inverted_residual_forward.1} parent=11 // pred_fallthru
        _
    $region12: #{inverted_residual_forward.1} parent=5 // pred_fallthru
      _
    %p199 = scmp.lt.s32.totalorder %s12, 2
    // Predicated region
    $region33: #{inverted_residual_forward.1} parent=5 // pred_check
      %p200 = pneg %p199
    $region34: #{inverted_residual_forward.1} parent=5 // pred_check_branch
      %202 = sbr.rel (%p200) target = $region36
    $region35: #{inverted_residual_forward.1} parent=5 // pred_region
      // Predicated region
      $region37: #{inverted_residual_forward.1} parent=35 // pred_check
        %p203 = pneg %p32
      $region38: #{inverted_residual_forward.1} parent=35 // pred_check_branch
        %205 = sbr.rel (%p203) target = $region40
      $region39: #{inverted_residual_forward.1} parent=35 // pred_region
        %p206 = scmp.lt.s32.totalorder %s12, 1
        %s207 = scalar_select %p206, %s12, 1
        %s208 = smul.addr %s207, 32
        %s209 = smul.addr %s208, 8
        %s210 = scalar_lea.vmem %s0, %s209
      $region40: #{inverted_residual_forward.1} parent=35 // pred_fallthru
        _
    $region36: #{inverted_residual_forward.1} parent=5 // pred_fallthru
      _
    %p211 = scmp.le.s32.totalorder 1, %s12
    %p212 = scmp.lt.s32.totalorder %s12, 3
    %p213 = pnand %p211, %p212
    %p214 = pneg %p213
    // Predicated region
    $region41: #{inverted_residual_forward.1} parent=5 // pred_check
      _
    $region42: #{inverted_residual_forward.1} parent=5 // pred_check_branch
      %216 = sbr.rel (%p213) target = $region44
    $region43: #{inverted_residual_forward.1} parent=5 // pred_region
      %s217 = ssub.s32 %s12, 1
      %p218 = scmp.lt.s32.totalorder %s17, 1
      %s219 = scalar_select %p218, %s17, 1
      %s220 = smul.addr %s219, 32
      %s221 = smul.addr %s220, 8
      %s222 = scalar_lea.vmem %s0, %s221
      %p223 = pneg %p38
      %p224 = pneg %p35
      %p225 = pneg %p59
      %p226 = pneg %p56
      %p227 = pneg %p80
      %p228 = pneg %p77
      %p229 = pneg %p101
      %p230 = pneg %p98
      %p231 = pneg %p122
      %p232 = pneg %p119
      %p233 = pneg %p143
      %p234 = pneg %p140
      %p235 = pneg %p169
      %p236 = pneg %p166
      %p237 = scmp.lt.s32.totalorder %s17, 1
      %s238 = scalar_select %p237, %s17, 1
      %s239 = smul.addr %s238, 32
      %s240 = smul.addr %s239, 8
      %s241 = scalar_lea.vmem %s6, %s240
      %p242 = scmp.lt.s32.totalorder %s17, 1
      %s243 = scalar_select %p242, %s17, 1
      %s244 = smul.addr %s243, 32
      %s245 = smul.addr %s244, 8
      %s246 = scalar_lea.vmem %s0, %s245
      %p247 = scmp.lt.s32.totalorder %s17, 1
      %s248 = scalar_select %p247, %s17, 1
      %s249 = smul.addr %s248, 32
      %s250 = smul.addr %s249, 8
      %s251 = scalar_lea.vmem %s6, %s250
      %v252 = vld [vmem:[%s246] sm:$0xff]
      %v253 = vld [vmem:[%s246 + $0x8] sm:$0xff]
      %v254 = vld [vmem:[%s246 + $0x10] sm:$0xff]
      %v255 = vld [vmem:[%s246 + $0x18] sm:$0xff]
      %v256 = vld [vmem:[%s246 + $0x20] sm:$0xff]
      %v257 = vld [vmem:[%s246 + $0x28] sm:$0xff]
      %v258 = vld [vmem:[%s246 + $0x30] sm:$0xff]
      %v259 = vld [vmem:[%s246 + $0x38] sm:$0xff]
      %v260 = vld [vmem:[%s246 + $0x40] sm:$0xff]
      %v261 = vld [vmem:[%s246 + $0x48] sm:$0xff]
      %v262 = vld [vmem:[%s246 + $0x50] sm:$0xff]
      %v263 = vld [vmem:[%s246 + $0x58] sm:$0xff]
      %v264 = vld [vmem:[%s246 + $0x60] sm:$0xff]
      %v265 = vld [vmem:[%s246 + $0x68] sm:$0xff]
      %v266 = vld [vmem:[%s246 + $0x70] sm:$0xff]
      %v267 = vld [vmem:[%s246 + $0x78] sm:$0xff]
      %v268 = vld [vmem:[%s246 + $0x80] sm:$0xff]
      %v269 = vld [vmem:[%s246 + $0x88] sm:$0xff]
      %v270 = vld [vmem:[%s246 + $0x90] sm:$0xff]
      %v271 = vld [vmem:[%s246 + $0x98] sm:$0xff]
      %v272 = vld [vmem:[%s246 + $0xa0] sm:$0xff]
      %v273 = vld [vmem:[%s246 + $0xa8] sm:$0xff]
      %v274 = vld [vmem:[%s246 + $0xb0] sm:$0xff]
      %v275 = vld [vmem:[%s246 + $0xb8] sm:$0xff]
      %v276 = vld [vmem:[%s246 + $0xc0] sm:$0xff]
      %v277 = vld [vmem:[%s246 + $0xc8] sm:$0xff]
      %v278 = vld [vmem:[%s246 + $0xd0] sm:$0xff]
      %v279 = vld [vmem:[%s246 + $0xd8] sm:$0xff]
      %v280 = vld [vmem:[%s246 + $0xe0] sm:$0xff]
      %v281 = vld [vmem:[%s246 + $0xe8] sm:$0xff]
      %v282 = vld [vmem:[%s246 + $0xf0] sm:$0xff]
      %v283 = vld [vmem:[%s246 + $0xf8] sm:$0xff]
      %v284 = vld [vmem:[%s2] sm:$0xff]
      %v285 = vld [vmem:[%s2 + $0x8] sm:$0xff]
      %v286 = vld [vmem:[%s2 + $0x10] sm:$0xff]
      %v287 = vld [vmem:[%s2 + $0x18] sm:$0xff]
      %v288 = vld [vmem:[%s2 + $0x20] sm:$0xff]
      %v289 = vld [vmem:[%s2 + $0x28] sm:$0xff]
      %v290 = vld [vmem:[%s2 + $0x30] sm:$0xff]
      %v291 = vld [vmem:[%s2 + $0x38] sm:$0xff]
      %v292 = vld [vmem:[%s1 + $0x9] sm:$0x1]
      %v293 = vlaneseq
      %v294 = vshrl.u32 %v293, 7
      %v295 = vsub.s32 0, %v294
      %v296 = vrot.slane %v292, %v295
      %vm297 = vcmask 523264
      %v299 = vsel %vm297, %v252, 0
      %v302 = vsel %vm297, %v253, 0
      %v305 = vsel %vm297, %v254, 0
      %v308 = vsel %vm297, %v255, 0
      %v311 = vsel %vm297, %v256, 0
      %v314 = vsel %vm297, %v257, 0
      %v317 = vsel %vm297, %v258, 0
      %v320 = vsel %vm297, %v259, 0
      %v323 = vsel %vm297, %v260, 0
      %v326 = vsel %vm297, %v261, 0
      %v329 = vsel %vm297, %v262, 0
      %v332 = vsel %vm297, %v263, 0
      %v335 = vsel %vm297, %v264, 0
      %v338 = vsel %vm297, %v265, 0
      %v341 = vsel %vm297, %v266, 0
      %v344 = vsel %vm297, %v267, 0
      %v347 = vsel %vm297, %v268, 0
      %v350 = vsel %vm297, %v269, 0
      %v353 = vsel %vm297, %v270, 0
      %v356 = vsel %vm297, %v271, 0
      %v359 = vsel %vm297, %v272, 0
      %v362 = vsel %vm297, %v273, 0
      %v365 = vsel %vm297, %v274, 0
      %v368 = vsel %vm297, %v275, 0
      %v371 = vsel %vm297, %v276, 0
      %v374 = vsel %vm297, %v277, 0
      %v377 = vsel %vm297, %v278, 0
      %v380 = vsel %vm297, %v279, 0
      %v383 = vsel %vm297, %v280, 0
      %v386 = vsel %vm297, %v281, 0
      %v389 = vsel %vm297, %v282, 0
      %v392 = vsel %vm297, %v283, 0
      %394 = vmatprep.subr.mxu0 0.0
      %395 = vmatpush1.msra.mxu0 %v284
      %396 = vmatprep.subr.mxu0 0.0
      %397 = vmatpush1.msra.mxu0 %v285
      %398 = vmatprep.subr.mxu0 0.0
      %399 = vmatpush1.msra.mxu0 %v286
      %400 = vmatprep.subr.mxu0 0.0
      %401 = vmatpush1.msra.mxu0 %v287
      %402 = vmatprep.subr.mxu0 0.0
      %403 = vmatpush1.msra.mxu0 %v288
      %404 = vmatprep.subr.mxu0 0.0
      %405 = vmatpush1.msra.mxu0 %v289
      %406 = vmatprep.subr.mxu0 0.0
      %407 = vmatpush1.msra.mxu0 %v290
      %408 = vmatprep.subr.mxu0 0.0
      %409 = vmatpush1.msra.mxu0 %v291
      %410 = vmatprep.subr.mxu0 0.0
      %411 = vmatpush1.msra.mxu0 0.0
      %412 = vmatprep.subr.mxu0 0.0
      %413 = vmatpush1.msra.mxu0 0.0
      %414 = vmatprep.subr.mxu0 0.0
      %415 = vmatpush1.msra.mxu0 0.0
      %416 = vmatprep.subr.mxu0 0.0
      %417 = vmatpush1.msra.mxu0 0.0
      %418 = vmatprep.subr.mxu0 0.0
      %419 = vmatpush1.msra.mxu0 0.0
      %420 = vmatprep.subr.mxu0 0.0
      %421 = vmatpush1.msra.mxu0 0.0
      %422 = vmatprep.subr.mxu0 0.0
      %423 = vmatpush1.msra.mxu0 0.0
      %424 = vmatprep.subr.mxu0 0.0
      %425 = vmatpush1.msra.mxu0 0.0
      %426 = vmatprep.subr.mxu0 0.0
      %427 = vmatpush1.msra.mxu0 0.0
      %428 = vmatprep.subr.mxu0 0.0
      %429 = vmatpush1.msra.mxu0 0.0
      %430 = vmatprep.subr.mxu0 0.0
      %431 = vmatpush1.msra.mxu0 0.0
      %432 = vmatprep.subr.mxu0 0.0
      %433 = vmatpush1.msra.mxu0 0.0
      %434 = vmatprep.subr.mxu0 0.0
      %435 = vmatpush1.msra.mxu0 0.0
      %436 = vmatprep.subr.mxu0 0.0
      %437 = vmatpush1.msra.mxu0 0.0
      %438 = vmatprep.subr.mxu0 0.0
      %439 = vmatpush1.msra.mxu0 0.0
      %440 = vmatprep.subr.mxu0 0.0
      %441 = vmatpush1.msra.mxu0 0.0
      %442 = vmatprep.subr.mxu0 0.0
      %443 = vmatpush1.msra.mxu0 0.0
      %444 = vmatprep.subr.mxu0 0.0
      %445 = vmatpush1.msra.mxu0 0.0
      %446 = vmatprep.subr.mxu0 0.0
      %447 = vmatpush1.msra.mxu0 0.0
      %448 = vmatprep.subr.mxu0 0.0
      %449 = vmatpush1.msra.mxu0 0.0
      %450 = vmatprep.subr.mxu0 0.0
      %451 = vmatpush1.msra.mxu0 0.0
      %452 = vmatprep.subr.mxu0 0.0
      %453 = vmatpush1.msra.mxu0 0.0
      %454 = vmatprep.subr.mxu0 0.0
      %455 = vmatpush1.msra.mxu0 0.0
      %456 = vmatprep.subr.mxu0 0.0
      %457 = vmatpush1.msra.mxu0 0.0
      %458 = vmatprep.mubr.f32.mxu0 0.0
      %459 = vmatmul.mubr.f32.gmra.mrb[0].mxu0 %v299
      %v460 = vpop.f32.mrb[0].mxu0
      %v461 = vadd.f32 %v296, %v460
      %v462 = vpop.f32.mrb[0].mxu0
      %463 = vmatprep.mubr.f32.mxu0 0.0
      %464 = vmatmul.mubr.f32.gmra.mrb[0].mxu0 %v302
      %v465 = vpop.f32.mrb[0].mxu0
      %v466 = vadd.f32 %v296, %v465
      %v467 = vpop.f32.mrb[0].mxu0
      %468 = vmatprep.mubr.f32.mxu0 0.0
      %469 = vmatmul.mubr.f32.gmra.mrb[0].mxu0 %v305
      %v470 = vpop.f32.mrb[0].mxu0
      %v471 = vadd.f32 %v296, %v470
      %v472 = vpop.f32.mrb[0].mxu0
      %473 = vmatprep.mubr.f32.mxu0 0.0
      %474 = vmatmul.mubr.f32.gmra.mrb[0].mxu0 %v308
      %v475 = vpop.f32.mrb[0].mxu0
      %v476 = vadd.f32 %v296, %v475
      %v477 = vpop.f32.mrb[0].mxu0
      %478 = vmatprep.mubr.f32.mxu0 0.0
      %479 = vmatmul.mubr.f32.gmra.mrb[0].mxu0 %v311
      %v480 = vpop.f32.mrb[0].mxu0
      %v481 = vadd.f32 %v296, %v480
      %v482 = vpop.f32.mrb[0].mxu0
      %483 = vmatprep.mubr.f32.mxu0 0.0
      %484 = vmatmul.mubr.f32.gmra.mrb[0].mxu0 %v314
      %v485 = vpop.f32.mrb[0].mxu0
      %v486 = vadd.f32 %v296, %v485
      %v487 = vpop.f32.mrb[0].mxu0
      %488 = vmatprep.mubr.f32.mxu0 0.0
      %489 = vmatmul.mubr.f32.gmra.mrb[0].mxu0 %v317
      %v490 = vpop.f32.mrb[0].mxu0
      %v491 = vadd.f32 %v296, %v490
      %v492 = vpop.f32.mrb[0].mxu0
      %493 = vmatprep.mubr.f32.mxu0 0.0
      %494 = vmatmul.mubr.f32.gmra.mrb[0].mxu0 %v320
      %v495 = vpop.f32.mrb[0].mxu0
      %v496 = vadd.f32 %v296, %v495
      %v497 = vpop.f32.mrb[0].mxu0
      %498 = vmatprep.mubr.f32.mxu0 0.0
      %499 = vmatmul.mubr.f32.gmra.mrb[0].mxu0 %v323
      %v500 = vpop.f32.mrb[0].mxu0
      %v501 = vadd.f32 %v296, %v500
      %v502 = vpop.f32.mrb[0].mxu0
      %503 = vmatprep.mubr.f32.mxu0 0.0
      %504 = vmatmul.mubr.f32.gmra.mrb[0].mxu0 %v326
      %v505 = vpop.f32.mrb[0].mxu0
      %v506 = vadd.f32 %v296, %v505
      %v507 = vpop.f32.mrb[0].mxu0
      %508 = vmatprep.mubr.f32.mxu0 0.0
      %509 = vmatmul.mubr.f32.gmra.mrb[0].mxu0 %v329
      %v510 = vpop.f32.mrb[0].mxu0
      %v511 = vadd.f32 %v296, %v510
      %v512 = vpop.f32.mrb[0].mxu0
      %513 = vmatprep.mubr.f32.mxu0 0.0
      %514 = vmatmul.mubr.f32.gmra.mrb[0].mxu0 %v332
      %v515 = vpop.f32.mrb[0].mxu0
      %v516 = vadd.f32 %v296, %v515
      %v517 = vpop.f32.mrb[0].mxu0
      %518 = vmatprep.mubr.f32.mxu0 0.0
      %519 = vmatmul.mubr.f32.gmra.mrb[0].mxu0 %v335
      %v520 = vpop.f32.mrb[0].mxu0
      %v521 = vadd.f32 %v296, %v520
      %v522 = vpop.f32.mrb[0].mxu0
      %523 = vmatprep.mubr.f32.mxu0 0.0
      %524 = vmatmul.mubr.f32.gmra.mrb[0].mxu0 %v338
      %v525 = vpop.f32.mrb[0].mxu0
      %v526 = vadd.f32 %v296, %v525
      %v527 = vpop.f32.mrb[0].mxu0
      %528 = vmatprep.mubr.f32.mxu0 0.0
      %529 = vmatmul.mubr.f32.gmra.mrb[0].mxu0 %v341
      %v530 = vpop.f32.mrb[0].mxu0
      %v531 = vadd.f32 %v296, %v530
      %v532 = vpop.f32.mrb[0].mxu0
      %533 = vmatprep.mubr.f32.mxu0 0.0
      %534 = vmatmul.mubr.f32.gmra.mrb[0].mxu0 %v344
      %v535 = vpop.f32.mrb[0].mxu0
      %v536 = vadd.f32 %v296, %v535
      %v537 = vpop.f32.mrb[0].mxu0
      %538 = vmatprep.mubr.f32.mxu0 0.0
      %539 = vmatmul.mubr.f32.gmra.mrb[0].mxu0 %v347
      %v540 = vpop.f32.mrb[0].mxu0
      %v541 = vadd.f32 %v296, %v540
      %v542 = vpop.f32.mrb[0].mxu0
      %543 = vmatprep.mubr.f32.mxu0 0.0
      %544 = vmatmul.mubr.f32.gmra.mrb[0].mxu0 %v350
      %v545 = vpop.f32.mrb[0].mxu0
      %v546 = vadd.f32 %v296, %v545
      %v547 = vpop.f32.mrb[0].mxu0
      %548 = vmatprep.mubr.f32.mxu0 0.0
      %549 = vmatmul.mubr.f32.gmra.mrb[0].mxu0 %v353
      %v550 = vpop.f32.mrb[0].mxu0
      %v551 = vadd.f32 %v296, %v550
      %v552 = vpop.f32.mrb[0].mxu0
      %553 = vmatprep.mubr.f32.mxu0 0.0
      %554 = vmatmul.mubr.f32.gmra.mrb[0].mxu0 %v356
      %v555 = vpop.f32.mrb[0].mxu0
      %v556 = vadd.f32 %v296, %v555
      %v557 = vpop.f32.mrb[0].mxu0
      %558 = vmatprep.mubr.f32.mxu0 0.0
      %559 = vmatmul.mubr.f32.gmra.mrb[0].mxu0 %v359
      %v560 = vpop.f32.mrb[0].mxu0
      %v561 = vadd.f32 %v296, %v560
      %v562 = vpop.f32.mrb[0].mxu0
      %563 = vmatprep.mubr.f32.mxu0 0.0
      %564 = vmatmul.mubr.f32.gmra.mrb[0].mxu0 %v362
      %v565 = vpop.f32.mrb[0].mxu0
      %v566 = vadd.f32 %v296, %v565
      %v567 = vpop.f32.mrb[0].mxu0
      %568 = vmatprep.mubr.f32.mxu0 0.0
      %569 = vmatmul.mubr.f32.gmra.mrb[0].mxu0 %v365
      %v570 = vpop.f32.mrb[0].mxu0
      %v571 = vadd.f32 %v296, %v570
      %v572 = vpop.f32.mrb[0].mxu0
      %573 = vmatprep.mubr.f32.mxu0 0.0
      %574 = vmatmul.mubr.f32.gmra.mrb[0].mxu0 %v368
      %v575 = vpop.f32.mrb[0].mxu0
      %v576 = vadd.f32 %v296, %v575
      %v577 = vpop.f32.mrb[0].mxu0
      %578 = vmatprep.mubr.f32.mxu0 0.0
      %579 = vmatmul.mubr.f32.gmra.mrb[0].mxu0 %v371
      %v580 = vpop.f32.mrb[0].mxu0
      %v581 = vadd.f32 %v296, %v580
      %v582 = vpop.f32.mrb[0].mxu0
      %583 = vmatprep.mubr.f32.mxu0 0.0
      %584 = vmatmul.mubr.f32.gmra.mrb[0].mxu0 %v374
      %v585 = vpop.f32.mrb[0].mxu0
      %v586 = vadd.f32 %v296, %v585
      %v587 = vpop.f32.mrb[0].mxu0
      %588 = vmatprep.mubr.f32.mxu0 0.0
      %589 = vmatmul.mubr.f32.gmra.mrb[0].mxu0 %v377
      %v590 = vpop.f32.mrb[0].mxu0
      %v591 = vadd.f32 %v296, %v590
      %v592 = vpop.f32.mrb[0].mxu0
      %593 = vmatprep.mubr.f32.mxu0 0.0
      %594 = vmatmul.mubr.f32.gmra.mrb[0].mxu0 %v380
      %v595 = vpop.f32.mrb[0].mxu0
      %v596 = vadd.f32 %v296, %v595
      %v597 = vpop.f32.mrb[0].mxu0
      %598 = vmatprep.mubr.f32.mxu0 0.0
      %599 = vmatmul.mubr.f32.gmra.mrb[0].mxu0 %v383
      %v600 = vpop.f32.mrb[0].mxu0
      %v601 = vadd.f32 %v296, %v600
      %v602 = vpop.f32.mrb[0].mxu0
      %603 = vmatprep.mubr.f32.mxu0 0.0
      %604 = vmatmul.mubr.f32.gmra.mrb[0].mxu0 %v386
      %v605 = vpop.f32.mrb[0].mxu0
      %v606 = vadd.f32 %v296, %v605
      %v607 = vpop.f32.mrb[0].mxu0
      %608 = vmatprep.mubr.f32.mxu0 0.0
      %609 = vmatmul.mubr.f32.gmra.mrb[0].mxu0 %v389
      %v610 = vpop.f32.mrb[0].mxu0
      %v611 = vadd.f32 %v296, %v610
      %v612 = vpop.f32.mrb[0].mxu0
      %613 = vmatprep.mubr.f32.mxu0 0.0
      %614 = vmatmul.mubr.f32.gmra.mrb[0].mxu0 %v392
      %v615 = vpop.f32.mrb[0].mxu0
      %v616 = vadd.f32 %v296, %v615
      %v617 = vpop.f32.mrb[0].mxu0
      %618 = vdwg.mxu0
      %v619 = vadd.f32 %v461, 3.0
      %v620 = vadd.f32 %v466, 3.0
      %v621 = vadd.f32 %v471, 3.0
      %v622 = vadd.f32 %v476, 3.0
      %v623 = vadd.f32 %v481, 3.0
      %v624 = vadd.f32 %v486, 3.0
      %v625 = vadd.f32 %v491, 3.0
      %v626 = vadd.f32 %v496, 3.0
      %v627 = vadd.f32 %v501, 3.0
      %v628 = vadd.f32 %v506, 3.0
      %v629 = vadd.f32 %v511, 3.0
      %v630 = vadd.f32 %v516, 3.0
      %v631 = vadd.f32 %v521, 3.0
      %v632 = vadd.f32 %v526, 3.0
      %v633 = vadd.f32 %v531, 3.0
      %v634 = vadd.f32 %v536, 3.0
      %v635 = vadd.f32 %v541, 3.0
      %v636 = vadd.f32 %v546, 3.0
      %v637 = vadd.f32 %v551, 3.0
      %v638 = vadd.f32 %v556, 3.0
      %v639 = vadd.f32 %v561, 3.0
      %v640 = vadd.f32 %v566, 3.0
      %v641 = vadd.f32 %v571, 3.0
      %v642 = vadd.f32 %v576, 3.0
      %v643 = vadd.f32 %v581, 3.0
      %v644 = vadd.f32 %v586, 3.0
      %v645 = vadd.f32 %v591, 3.0
      %v646 = vadd.f32 %v596, 3.0
      %v647 = vadd.f32 %v601, 3.0
      %v648 = vadd.f32 %v606, 3.0
      %v649 = vadd.f32 %v611, 3.0
      %v650 = vadd.f32 %v616, 3.0
      %v651 = vmax.f32 %v619, 0.0
      %v652 = vmax.f32 %v620, 0.0
      %v653 = vmax.f32 %v621, 0.0
      %v654 = vmax.f32 %v622, 0.0
      %v655 = vmax.f32 %v623, 0.0
      %v656 = vmax.f32 %v624, 0.0
      %v657 = vmax.f32 %v625, 0.0
      %v658 = vmax.f32 %v626, 0.0
      %v659 = vmax.f32 %v627, 0.0
      %v660 = vmax.f32 %v628, 0.0
      %v661 = vmax.f32 %v629, 0.0
      %v662 = vmax.f32 %v630, 0.0
      %v663 = vmax.f32 %v631, 0.0
      %v664 = vmax.f32 %v632, 0.0
      %v665 = vmax.f32 %v633, 0.0
      %v666 = vmax.f32 %v634, 0.0
      %v667 = vmax.f32 %v635, 0.0
      %v668 = vmax.f32 %v636, 0.0
      %v669 = vmax.f32 %v637, 0.0
      %v670 = vmax.f32 %v638, 0.0
      %v671 = vmax.f32 %v639, 0.0
      %v672 = vmax.f32 %v640, 0.0
      %v673 = vmax.f32 %v641, 0.0
      %v674 = vmax.f32 %v642, 0.0
      %v675 = vmax.f32 %v643, 0.0
      %v676 = vmax.f32 %v644, 0.0
      %v677 = vmax.f32 %v645, 0.0
      %v678 = vmax.f32 %v646, 0.0
      %v679 = vmax.f32 %v647, 0.0
      %v680 = vmax.f32 %v648, 0.0
      %v681 = vmax.f32 %v649, 0.0
      %v682 = vmax.f32 %v650, 0.0
      %v683 = vmin.f32 %v651, 6.0
      %v684 = vmin.f32 %v652, 6.0
      %v685 = vmin.f32 %v653, 6.0
      %v686 = vmin.f32 %v654, 6.0
      %v687 = vmin.f32 %v655, 6.0
      %v688 = vmin.f32 %v656, 6.0
      %v689 = vmin.f32 %v657, 6.0
      %v690 = vmin.f32 %v658, 6.0
      %v691 = vmin.f32 %v659, 6.0
      %v692 = vmin.f32 %v660, 6.0
      %v693 = vmin.f32 %v661, 6.0
      %v694 = vmin.f32 %v662, 6.0
      %v695 = vmin.f32 %v663, 6.0
      %v696 = vmin.f32 %v664, 6.0
      %v697 = vmin.f32 %v665, 6.0
      %v698 = vmin.f32 %v666, 6.0
      %v699 = vmin.f32 %v667, 6.0
      %v700 = vmin.f32 %v668, 6.0
      %v701 = vmin.f32 %v669, 6.0
      %v702 = vmin.f32 %v670, 6.0
      %v703 = vmin.f32 %v671, 6.0
      %v704 = vmin.f32 %v672, 6.0
      %v705 = vmin.f32 %v673, 6.0
      %v706 = vmin.f32 %v674, 6.0
      %v707 = vmin.f32 %v675, 6.0
      %v708 = vmin.f32 %v676, 6.0
      %v709 = vmin.f32 %v677, 6.0
      %v710 = vmin.f32 %v678, 6.0
      %v711 = vmin.f32 %v679, 6.0
      %v712 = vmin.f32 %v680, 6.0
      %v713 = vmin.f32 %v681, 6.0
      %v714 = vmin.f32 %v682, 6.0
      %v715 = vmul.f32 %v683, 0.16666667
      %v716 = vmul.f32 %v684, 0.16666667
      %v717 = vmul.f32 %v685, 0.16666667
      %v718 = vmul.f32 %v686, 0.16666667
      %v719 = vmul.f32 %v687, 0.16666667
      %v720 = vmul.f32 %v688, 0.16666667
      %v721 = vmul.f32 %v689, 0.16666667
      %v722 = vmul.f32 %v690, 0.16666667
      %v723 = vmul.f32 %v691, 0.16666667
      %v724 = vmul.f32 %v692, 0.16666667
      %v725 = vmul.f32 %v693, 0.16666667
      %v726 = vmul.f32 %v694, 0.16666667
      %v727 = vmul.f32 %v695, 0.16666667
      %v728 = vmul.f32 %v696, 0.16666667
      %v729 = vmul.f32 %v697, 0.16666667
      %v730 = vmul.f32 %v698, 0.16666667
      %v731 = vmul.f32 %v699, 0.16666667
      %v732 = vmul.f32 %v700, 0.16666667
      %v733 = vmul.f32 %v701, 0.16666667
      %v734 = vmul.f32 %v702, 0.16666667
      %v735 = vmul.f32 %v703, 0.16666667
      %v736 = vmul.f32 %v704, 0.16666667
      %v737 = vmul.f32 %v705, 0.16666667
      %v738 = vmul.f32 %v706, 0.16666667
      %v739 = vmul.f32 %v707, 0.16666667
      %v740 = vmul.f32 %v708, 0.16666667
      %v741 = vmul.f32 %v709, 0.16666667
      %v742 = vmul.f32 %v710, 0.16666667
      %v743 = vmul.f32 %v711, 0.16666667
      %v744 = vmul.f32 %v712, 0.16666667
      %v745 = vmul.f32 %v713, 0.16666667
      %v746 = vmul.f32 %v714, 0.16666667
      %v747 = vmul.f32 %v461, %v715
      %v748 = vmul.f32 %v466, %v716
      %v749 = vmul.f32 %v471, %v717
      %v750 = vmul.f32 %v476, %v718
      %v751 = vmul.f32 %v481, %v719
      %v752 = vmul.f32 %v486, %v720
      %v753 = vmul.f32 %v491, %v721
      %v754 = vmul.f32 %v496, %v722
      %v755 = vmul.f32 %v501, %v723
      %v756 = vmul.f32 %v506, %v724
      %v757 = vmul.f32 %v511, %v725
      %v758 = vmul.f32 %v516, %v726
      %v759 = vmul.f32 %v521, %v727
      %v760 = vmul.f32 %v526, %v728
      %v761 = vmul.f32 %v531, %v729
      %v762 = vmul.f32 %v536, %v730
      %v763 = vmul.f32 %v541, %v731
      %v764 = vmul.f32 %v546, %v732
      %v765 = vmul.f32 %v551, %v733
      %v766 = vmul.f32 %v556, %v734
      %v767 = vmul.f32 %v561, %v735
      %v768 = vmul.f32 %v566, %v736
      %v769 = vmul.f32 %v571, %v737
      %v770 = vmul.f32 %v576, %v738
      %v771 = vmul.f32 %v581, %v739
      %v772 = vmul.f32 %v586, %v740
      %v773 = vmul.f32 %v591, %v741
      %v774 = vmul.f32 %v596, %v742
      %v775 = vmul.f32 %v601, %v743
      %v776 = vmul.f32 %v606, %v744
      %v777 = vmul.f32 %v611, %v745
      %v778 = vmul.f32 %v616, %v746
      %779 = vst [vmem:[#allocation2] sm:$0xff] 0.0
      %780 = vst [vmem:[#allocation2 + $0x8] sm:$0xff] 0.0
      %781 = vst [vmem:[#allocation2 + $0x10] sm:$0x3] 0.0
      %s782 = scalar_lea.vmem [#allocation2], 408
      %783 = vst [vmem:[%s782] sm:$0xff] 0.0
      %784 = vst [vmem:[%s782 + $0x8] sm:$0xff] 0.0
      %785 = vst [vmem:[%s782 + $0x10] sm:$0x3] 0.0
      %s786 = scalar_lea.vmem [#allocation2], 24
      %787 = vst [vmem:[%s786] sm:$0x1] 0.0
      %788 = vst [vmem:[%s786 + $0x18] sm:$0x1] 0.0
      %789 = vst [vmem:[%s786 + $0x30] sm:$0x1] 0.0
      %790 = vst [vmem:[%s786 + $0x48] sm:$0x1] 0.0
      %791 = vst [vmem:[%s786 + $0x60] sm:$0x1] 0.0
      %792 = vst [vmem:[%s786 + $0x78] sm:$0x1] 0.0
      %793 = vst [vmem:[%s786 + $0x90] sm:$0x1] 0.0
      %794 = vst [vmem:[%s786 + $0xa8] sm:$0x1] 0.0
      %795 = vst [vmem:[%s786 + $0xc0] sm:$0x1] 0.0
      %796 = vst [vmem:[%s786 + $0xd8] sm:$0x1] 0.0
      %797 = vst [vmem:[%s786 + $0xf0] sm:$0x1] 0.0
      %798 = vst [vmem:[%s786 + $0x108] sm:$0x1] 0.0
      %799 = vst [vmem:[%s786 + $0x120] sm:$0x1] 0.0
      %800 = vst [vmem:[%s786 + $0x138] sm:$0x1] 0.0
      %801 = vst [vmem:[%s786 + $0x150] sm:$0x1] 0.0
      %802 = vst [vmem:[%s786 + $0x168] sm:$0x1] 0.0
      %803 = vst [vmem:[%s786 + $0x11] sm:$0x1] 0.0
      %804 = vst [vmem:[%s786 + $0x29] sm:$0x1] 0.0
      %805 = vst [vmem:[%s786 + $0x41] sm:$0x1] 0.0
      %806 = vst [vmem:[%s786 + $0x59] sm:$0x1] 0.0
      %807 = vst [vmem:[%s786 + $0x71] sm:$0x1] 0.0
      %808 = vst [vmem:[%s786 + $0x89] sm:$0x1] 0.0
      %809 = vst [vmem:[%s786 + $0xa1] sm:$0x1] 0.0
      %810 = vst [vmem:[%s786 + $0xb9] sm:$0x1] 0.0
      %811 = vst [vmem:[%s786 + $0xd1] sm:$0x1] 0.0
      %812 = vst [vmem:[%s786 + $0xe9] sm:$0x1] 0.0
      %813 = vst [vmem:[%s786 + $0x101] sm:$0x1] 0.0
      %814 = vst [vmem:[%s786 + $0x119] sm:$0x1] 0.0
      %815 = vst [vmem:[%s786 + $0x131] sm:$0x1] 0.0
      %816 = vst [vmem:[%s786 + $0x149] sm:$0x1] 0.0
      %817 = vst [vmem:[%s786 + $0x161] sm:$0x1] 0.0
      %818 = vst [vmem:[%s786 + $0x179] sm:$0x1] 0.0
      %819 = vst [vmem:[%s786 + $0x1] sm:$0xff] %v747
      %820 = vst [vmem:[%s786 + $0x9] sm:$0xff] %v748
      %821 = vst [vmem:[%s786 + $0x19] sm:$0xff] %v749
      %822 = vst [vmem:[%s786 + $0x21] sm:$0xff] %v750
      %823 = vst [vmem:[%s786 + $0x31] sm:$0xff] %v751
      %824 = vst [vmem:[%s786 + $0x39] sm:$0xff] %v752
      %825 = vst [vmem:[%s786 + $0x49] sm:$0xff] %v753
      %826 = vst [vmem:[%s786 + $0x51] sm:$0xff] %v754
      %827 = vst [vmem:[%s786 + $0x61] sm:$0xff] %v755
      %828 = vst [vmem:[%s786 + $0x69] sm:$0xff] %v756
      %829 = vst [vmem:[%s786 + $0x79] sm:$0xff] %v757
      %830 = vst [vmem:[%s786 + $0x81] sm:$0xff] %v758
      %831 = vst [vmem:[%s786 + $0x91] sm:$0xff] %v759
      %832 = vst [vmem:[%s786 + $0x99] sm:$0xff] %v760
      %833 = vst [vmem:[%s786 + $0xa9] sm:$0xff] %v761
      %834 = vst [vmem:[%s786 + $0xb1] sm:$0xff] %v762
      %835 = vst [vmem:[%s786 + $0xc1] sm:$0xff] %v763
      %836 = vst [vmem:[%s786 + $0xc9] sm:$0xff] %v764
      %837 = vst [vmem:[%s786 + $0xd9] sm:$0xff] %v765
      %838 = vst [vmem:[%s786 + $0xe1] sm:$0xff] %v766
      %839 = vst [vmem:[%s786 + $0xf1] sm:$0xff] %v767
      %840 = vst [vmem:[%s786 + $0xf9] sm:$0xff] %v768
      %841 = vst [vmem:[%s786 + $0x109] sm:$0xff] %v769
      %842 = vst [vmem:[%s786 + $0x111] sm:$0xff] %v770
      %843 = vst [vmem:[%s786 + $0x121] sm:$0xff] %v771
      %844 = vst [vmem:[%s786 + $0x129] sm:$0xff] %v772
      %845 = vst [vmem:[%s786 + $0x139] sm:$0xff] %v773
      %846 = vst [vmem:[%s786 + $0x141] sm:$0xff] %v774
      %847 = vst [vmem:[%s786 + $0x151] sm:$0xff] %v775
      %848 = vst [vmem:[%s786 + $0x159] sm:$0xff] %v776
      %849 = vst [vmem:[%s786 + $0x169] sm:$0xff] %v777
      %850 = vst [vmem:[%s786 + $0x171] sm:$0xff] %v778
      %v851 = vld [vmem:[%s1] sm:$0xff]
      %v852 = vld [vmem:[%s1 + $0x8] sm:$0x1]
      %v853 = vld [vmem:[#allocation2] sm:$0xff]
      %v854 = vld [vmem:[#allocation2 + $0x8] sm:$0xff]
      %v855 = vld [vmem:[#allocation2 + $0x18] sm:$0xff]
      %v856 = vld [vmem:[#allocation2 + $0x20] sm:$0xff]
      %v857 = vld [vmem:[#allocation2 + $0x30] sm:$0xff]
      %v858 = vld [vmem:[#allocation2 + $0x38] sm:$0xff]
      %v859 = vld [vmem:[#allocation2 + $0x48] sm:$0xff]
      %v860 = vld [vmem:[#allocation2 + $0x50] sm:$0xff]
      %v861 = vld [vmem:[#allocation2 + $0x60] sm:$0xff]
      %v862 = vld [vmem:[#allocation2 + $0x68] sm:$0xff]
      %v863 = vld [vmem:[#allocation2 + $0x78] sm:$0xff]
      %v864 = vld [vmem:[#allocation2 + $0x80] sm:$0xff]
      %v865 = vld [vmem:[#allocation2 + $0x90] sm:$0xff]
      %v866 = vld [vmem:[#allocation2 + $0x98] sm:$0xff]
      %v867 = vld [vmem:[#allocation2 + $0xa8] sm:$0xff]
      %v868 = vld [vmem:[#allocation2 + $0xb0] sm:$0xff]
      %v869 = vld [vmem:[#allocation2 + $0xc0] sm:$0xff]
      %v870 = vld [vmem:[#allocation2 + $0xc8] sm:$0xff]
      %v871 = vld [vmem:[#allocation2 + $0xd8] sm:$0xff]
      %v872 = vld [vmem:[#allocation2 + $0xe0] sm:$0xff]
      %v873 = vld [vmem:[#allocation2 + $0xf0] sm:$0xff]
      %v874 = vld [vmem:[#allocation2 + $0xf8] sm:$0xff]
      %v875 = vld [vmem:[#allocation2 + $0x108] sm:$0xff]
      %v876 = vld [vmem:[#allocation2 + $0x110] sm:$0xff]
      %v877 = vld [vmem:[#allocation2 + $0x120] sm:$0xff]
      %v878 = vld [vmem:[#allocation2 + $0x128] sm:$0xff]
      %v879 = vld [vmem:[#allocation2 + $0x138] sm:$0xff]
      %v880 = vld [vmem:[#allocation2 + $0x140] sm:$0xff]
      %v881 = vld [vmem:[#allocation2 + $0x150] sm:$0xff]
      %v882 = vld [vmem:[#allocation2 + $0x158] sm:$0xff]
      %v883 = vld [vmem:[#allocation2 + $0x168] sm:$0xff]
      %v884 = vld [vmem:[#allocation2 + $0x170] sm:$0xff]
      %v885 = vld [vmem:[#allocation2 + $0x180] sm:$0xff]
      %v886 = vld [vmem:[#allocation2 + $0x188] sm:$0xff]
      %v887 = vld [vmem:[#allocation2 + $0x198] sm:$0xff]
      %v888 = vld [vmem:[#allocation2 + $0x1a0] sm:$0xff]
      %v889 = vlaneseq
      %v890 = vshrl.u32 %v889, 7
      %v891 = vsub.s32 0, %v890
      %v892 = vrot.slane %v851, %v891
      %v893 = vmul.f32 %v853, %v892
      %v894 = vmul.f32 %v854, %v892
      %v895 = vmul.f32 %v855, %v892
      %v896 = vmul.f32 %v856, %v892
      %v897 = vmul.f32 %v857, %v892
      %v898 = vmul.f32 %v858, %v892
      %v899 = vmul.f32 %v859, %v892
      %v900 = vmul.f32 %v860, %v892
      %v901 = vmul.f32 %v861, %v892
      %v902 = vmul.f32 %v862, %v892
      %v903 = vmul.f32 %v863, %v892
      %v904 = vmul.f32 %v864, %v892
      %v905 = vmul.f32 %v865, %v892
      %v906 = vmul.f32 %v866, %v892
      %v907 = vmul.f32 %v867, %v892
      %v908 = vmul.f32 %v868, %v892
      %v909 = vmul.f32 %v869, %v892
      %v910 = vmul.f32 %v870, %v892
      %v911 = vmul.f32 %v871, %v892
      %v912 = vmul.f32 %v872, %v892
      %v913 = vmul.f32 %v873, %v892
      %v914 = vmul.f32 %v874, %v892
      %v915 = vmul.f32 %v875, %v892
      %v916 = vmul.f32 %v876, %v892
      %v917 = vmul.f32 %v877, %v892
      %v918 = vmul.f32 %v878, %v892
      %v919 = vmul.f32 %v879, %v892
      %v920 = vmul.f32 %v880, %v892
      %v921 = vmul.f32 %v881, %v892
      %v922 = vmul.f32 %v882, %v892
      %v923 = vmul.f32 %v883, %v892
      %v924 = vmul.f32 %v884, %v892
      %v925 = vlaneseq
      %v926 = vshrl.u32 %v925, 7
      %v927 = vsub.s32 3, %v926
      %v928 = vrot.slane %v851, %v927
      %v929 = vmul.f32 %v855, %v928
      %v930 = vmul.f32 %v856, %v928
      %v931 = vmul.f32 %v857, %v928
      %v932 = vmul.f32 %v858, %v928
      %v933 = vmul.f32 %v859, %v928
      %v934 = vmul.f32 %v860, %v928
      %v935 = vmul.f32 %v861, %v928
      %v936 = vmul.f32 %v862, %v928
      %v937 = vmul.f32 %v863, %v928
      %v938 = vmul.f32 %v864, %v928
      %v939 = vmul.f32 %v865, %v928
      %v940 = vmul.f32 %v866, %v928
      %v941 = vmul.f32 %v867, %v928
      %v942 = vmul.f32 %v868, %v928
      %v943 = vmul.f32 %v869, %v928
      %v944 = vmul.f32 %v870, %v928
      %v945 = vmul.f32 %v871, %v928
      %v946 = vmul.f32 %v872, %v928
      %v947 = vmul.f32 %v873, %v928
      %v948 = vmul.f32 %v874, %v928
      %v949 = vmul.f32 %v875, %v928
      %v950 = vmul.f32 %v876, %v928
      %v951 = vmul.f32 %v877, %v928
      %v952 = vmul.f32 %v878, %v928
      %v953 = vmul.f32 %v879, %v928
      %v954 = vmul.f32 %v880, %v928
      %v955 = vmul.f32 %v881, %v928
      %v956 = vmul.f32 %v882, %v928
      %v957 = vmul.f32 %v883, %v928
      %v958 = vmul.f32 %v884, %v928
      %v959 = vmul.f32 %v885, %v928
      %v960 = vmul.f32 %v886, %v928
      %v961 = vadd.f32 %v893, %v929
      %v962 = vadd.f32 %v894, %v930
      %v963 = vadd.f32 %v895, %v931
      %v964 = vadd.f32 %v896, %v932
      %v965 = vadd.f32 %v897, %v933
      %v966 = vadd.f32 %v898, %v934
      %v967 = vadd.f32 %v899, %v935
      %v968 = vadd.f32 %v900, %v936
      %v969 = vadd.f32 %v901, %v937
      %v970 = vadd.f32 %v902, %v938
      %v971 = vadd.f32 %v903, %v939
      %v972 = vadd.f32 %v904, %v940
      %v973 = vadd.f32 %v905, %v941
      %v974 = vadd.f32 %v906, %v942
      %v975 = vadd.f32 %v907, %v943
      %v976 = vadd.f32 %v908, %v944
      %v977 = vadd.f32 %v909, %v945
      %v978 = vadd.f32 %v910, %v946
      %v979 = vadd.f32 %v911, %v947
      %v980 = vadd.f32 %v912, %v948
      %v981 = vadd.f32 %v913, %v949
      %v982 = vadd.f32 %v914, %v950
      %v983 = vadd.f32 %v915, %v951
      %v984 = vadd.f32 %v916, %v952
      %v985 = vadd.f32 %v917, %v953
      %v986 = vadd.f32 %v918, %v954
      %v987 = vadd.f32 %v919, %v955
      %v988 = vadd.f32 %v920, %v956
      %v989 = vadd.f32 %v921, %v957
      %v990 = vadd.f32 %v922, %v958
      %v991 = vadd.f32 %v923, %v959
      %v992 = vadd.f32 %v924, %v960
      %v993 = vlaneseq
      %v994 = vshrl.u32 %v993, 7
      %v995 = vsub.s32 6, %v994
      %v996 = vrot.slane %v851, %v995
      %v997 = vmul.f32 %v857, %v996
      %v998 = vmul.f32 %v858, %v996
      %v999 = vmul.f32 %v859, %v996
      %v1000 = vmul.f32 %v860, %v996
      %v1001 = vmul.f32 %v861, %v996
      %v1002 = vmul.f32 %v862, %v996
      %v1003 = vmul.f32 %v863, %v996
      %v1004 = vmul.f32 %v864, %v996
      %v1005 = vmul.f32 %v865, %v996
      %v1006 = vmul.f32 %v866, %v996
      %v1007 = vmul.f32 %v867, %v996
      %v1008 = vmul.f32 %v868, %v996
      %v1009 = vmul.f32 %v869, %v996
      %v1010 = vmul.f32 %v870, %v996
      %v1011 = vmul.f32 %v871, %v996
      %v1012 = vmul.f32 %v872, %v996
      %v1013 = vmul.f32 %v873, %v996
      %v1014 = vmul.f32 %v874, %v996
      %v1015 = vmul.f32 %v875, %v996
      %v1016 = vmul.f32 %v876, %v996
      %v1017 = vmul.f32 %v877, %v996
      %v1018 = vmul.f32 %v878, %v996
      %v1019 = vmul.f32 %v879, %v996
      %v1020 = vmul.f32 %v880, %v996
      %v1021 = vmul.f32 %v881, %v996
      %v1022 = vmul.f32 %v882, %v996
      %v1023 = vmul.f32 %v883, %v996
      %v1024 = vmul.f32 %v884, %v996
      %v1025 = vmul.f32 %v885, %v996
      %v1026 = vmul.f32 %v886, %v996
      %v1027 = vmul.f32 %v887, %v996
      %v1028 = vmul.f32 %v888, %v996
      %v1029 = vadd.f32 %v961, %v997
      %v1030 = vadd.f32 %v962, %v998
      %v1031 = vadd.f32 %v963, %v999
      %v1032 = vadd.f32 %v964, %v1000
      %v1033 = vadd.f32 %v965, %v1001
      %v1034 = vadd.f32 %v966, %v1002
      %v1035 = vadd.f32 %v967, %v1003
      %v1036 = vadd.f32 %v968, %v1004
      %v1037 = vadd.f32 %v969, %v1005
      %v1038 = vadd.f32 %v970, %v1006
      %v1039 = vadd.f32 %v971, %v1007
      %v1040 = vadd.f32 %v972, %v1008
      %v1041 = vadd.f32 %v973, %v1009
      %v1042 = vadd.f32 %v974, %v1010
      %v1043 = vadd.f32 %v975, %v1011
      %v1044 = vadd.f32 %v976, %v1012
      %v1045 = vadd.f32 %v977, %v1013
      %v1046 = vadd.f32 %v978, %v1014
      %v1047 = vadd.f32 %v979, %v1015
      %v1048 = vadd.f32 %v980, %v1016
      %v1049 = vadd.f32 %v981, %v1017
      %v1050 = vadd.f32 %v982, %v1018
      %v1051 = vadd.f32 %v983, %v1019
      %v1052 = vadd.f32 %v984, %v1020
      %v1053 = vadd.f32 %v985, %v1021
      %v1054 = vadd.f32 %v986, %v1022
      %v1055 = vadd.f32 %v987, %v1023
      %v1056 = vadd.f32 %v988, %v1024
      %v1057 = vadd.f32 %v989, %v1025
      %v1058 = vadd.f32 %v990, %v1026
      %v1059 = vadd.f32 %v991, %v1027
      %v1060 = vadd.f32 %v992, %v1028
      %v1061 = vld [vmem:[#allocation2 + $0x1] sm:$0xff]
      %v1062 = vld [vmem:[#allocation2 + $0x9] sm:$0xff]
      %v1063 = vld [vmem:[#allocation2 + $0x19] sm:$0xff]
      %v1064 = vld [vmem:[#allocation2 + $0x21] sm:$0xff]
      %v1065 = vld [vmem:[#allocation2 + $0x31] sm:$0xff]
      %v1066 = vld [vmem:[#allocation2 + $0x39] sm:$0xff]
      %v1067 = vld [vmem:[#allocation2 + $0x49] sm:$0xff]
      %v1068 = vld [vmem:[#allocation2 + $0x51] sm:$0xff]
      %v1069 = vld [vmem:[#allocation2 + $0x61] sm:$0xff]
      %v1070 = vld [vmem:[#allocation2 + $0x69] sm:$0xff]
      %v1071 = vld [vmem:[#allocation2 + $0x79] sm:$0xff]
      %v1072 = vld [vmem:[#allocation2 + $0x81] sm:$0xff]
      %v1073 = vld [vmem:[#allocation2 + $0x91] sm:$0xff]
      %v1074 = vld [vmem:[#allocation2 + $0x99] sm:$0xff]
      %v1075 = vld [vmem:[#allocation2 + $0xa9] sm:$0xff]
      %v1076 = vld [vmem:[#allocation2 + $0xb1] sm:$0xff]
      %v1077 = vld [vmem:[#allocation2 + $0xc1] sm:$0xff]
      %v1078 = vld [vmem:[#allocation2 + $0xc9] sm:$0xff]
      %v1079 = vld [vmem:[#allocation2 + $0xd9] sm:$0xff]
      %v1080 = vld [vmem:[#allocation2 + $0xe1] sm:$0xff]
      %v1081 = vld [vmem:[#allocation2 + $0xf1] sm:$0xff]
      %v1082 = vld [vmem:[#allocation2 + $0xf9] sm:$0xff]
      %v1083 = vld [vmem:[#allocation2 + $0x109] sm:$0xff]
      %v1084 = vld [vmem:[#allocation2 + $0x111] sm:$0xff]
      %v1085 = vld [vmem:[#allocation2 + $0x121] sm:$0xff]
      %v1086 = vld [vmem:[#allocation2 + $0x129] sm:$0xff]
      %v1087 = vld [vmem:[#allocation2 + $0x139] sm:$0xff]
      %v1088 = vld [vmem:[#allocation2 + $0x141] sm:$0xff]
      %v1089 = vld [vmem:[#allocation2 + $0x151] sm:$0xff]
      %v1090 = vld [vmem:[#allocation2 + $0x159] sm:$0xff]
      %v1091 = vld [vmem:[#allocation2 + $0x169] sm:$0xff]
      %v1092 = vld [vmem:[#allocation2 + $0x171] sm:$0xff]
      %v1093 = vld [vmem:[#allocation2 + $0x181] sm:$0xff]
      %v1094 = vld [vmem:[#allocation2 + $0x189] sm:$0xff]
      %v1095 = vld [vmem:[#allocation2 + $0x199] sm:$0xff]
      %v1096 = vld [vmem:[#allocation2 + $0x1a1] sm:$0xff]
      %v1097 = vlaneseq
      %v1098 = vshrl.u32 %v1097, 7
      %v1099 = vsub.s32 1, %v1098
      %v1100 = vrot.slane %v851, %v1099
      %v1101 = vmul.f32 %v1061, %v1100
      %v1102 = vmul.f32 %v1062, %v1100
      %v1103 = vmul.f32 %v1063, %v1100
      %v1104 = vmul.f32 %v1064, %v1100
      %v1105 = vmul.f32 %v1065, %v1100
      %v1106 = vmul.f32 %v1066, %v1100
      %v1107 = vmul.f32 %v1067, %v1100
      %v1108 = vmul.f32 %v1068, %v1100
      %v1109 = vmul.f32 %v1069, %v1100
      %v1110 = vmul.f32 %v1070, %v1100
      %v1111 = vmul.f32 %v1071, %v1100
      %v1112 = vmul.f32 %v1072, %v1100
      %v1113 = vmul.f32 %v1073, %v1100
      %v1114 = vmul.f32 %v1074, %v1100
      %v1115 = vmul.f32 %v1075, %v1100
      %v1116 = vmul.f32 %v1076, %v1100
      %v1117 = vmul.f32 %v1077, %v1100
      %v1118 = vmul.f32 %v1078, %v1100
      %v1119 = vmul.f32 %v1079, %v1100
      %v1120 = vmul.f32 %v1080, %v1100
      %v1121 = vmul.f32 %v1081, %v1100
      %v1122 = vmul.f32 %v1082, %v1100
      %v1123 = vmul.f32 %v1083, %v1100
      %v1124 = vmul.f32 %v1084, %v1100
      %v1125 = vmul.f32 %v1085, %v1100
      %v1126 = vmul.f32 %v1086, %v1100
      %v1127 = vmul.f32 %v1087, %v1100
      %v1128 = vmul.f32 %v1088, %v1100
      %v1129 = vmul.f32 %v1089, %v1100
      %v1130 = vmul.f32 %v1090, %v1100
      %v1131 = vmul.f32 %v1091, %v1100
      %v1132 = vmul.f32 %v1092, %v1100
      %v1133 = vadd.f32 %v1029, %v1101
      %v1134 = vadd.f32 %v1030, %v1102
      %v1135 = vadd.f32 %v1031, %v1103
      %v1136 = vadd.f32 %v1032, %v1104
      %v1137 = vadd.f32 %v1033, %v1105
      %v1138 = vadd.f32 %v1034, %v1106
      %v1139 = vadd.f32 %v1035, %v1107
      %v1140 = vadd.f32 %v1036, %v1108
      %v1141 = vadd.f32 %v1037, %v1109
      %v1142 = vadd.f32 %v1038, %v1110
      %v1143 = vadd.f32 %v1039, %v1111
      %v1144 = vadd.f32 %v1040, %v1112
      %v1145 = vadd.f32 %v1041, %v1113
      %v1146 = vadd.f32 %v1042, %v1114
      %v1147 = vadd.f32 %v1043, %v1115
      %v1148 = vadd.f32 %v1044, %v1116
      %v1149 = vadd.f32 %v1045, %v1117
      %v1150 = vadd.f32 %v1046, %v1118
      %v1151 = vadd.f32 %v1047, %v1119
      %v1152 = vadd.f32 %v1048, %v1120
      %v1153 = vadd.f32 %v1049, %v1121
      %v1154 = vadd.f32 %v1050, %v1122
      %v1155 = vadd.f32 %v1051, %v1123
      %v1156 = vadd.f32 %v1052, %v1124
      %v1157 = vadd.f32 %v1053, %v1125
      %v1158 = vadd.f32 %v1054, %v1126
      %v1159 = vadd.f32 %v1055, %v1127
      %v1160 = vadd.f32 %v1056, %v1128
      %v1161 = vadd.f32 %v1057, %v1129
      %v1162 = vadd.f32 %v1058, %v1130
      %v1163 = vadd.f32 %v1059, %v1131
      %v1164 = vadd.f32 %v1060, %v1132
      %v1165 = vlaneseq
      %v1166 = vshrl.u32 %v1165, 7
      %v1167 = vsub.s32 4, %v1166
      %v1168 = vrot.slane %v851, %v1167
      %v1169 = vmul.f32 %v1063, %v1168
      %v1170 = vmul.f32 %v1064, %v1168
      %v1171 = vmul.f32 %v1065, %v1168
      %v1172 = vmul.f32 %v1066, %v1168
      %v1173 = vmul.f32 %v1067, %v1168
      %v1174 = vmul.f32 %v1068, %v1168
      %v1175 = vmul.f32 %v1069, %v1168
      %v1176 = vmul.f32 %v1070, %v1168
      %v1177 = vmul.f32 %v1071, %v1168
      %v1178 = vmul.f32 %v1072, %v1168
      %v1179 = vmul.f32 %v1073, %v1168
      %v1180 = vmul.f32 %v1074, %v1168
      %v1181 = vmul.f32 %v1075, %v1168
      %v1182 = vmul.f32 %v1076, %v1168
      %v1183 = vmul.f32 %v1077, %v1168
      %v1184 = vmul.f32 %v1078, %v1168
      %v1185 = vmul.f32 %v1079, %v1168
      %v1186 = vmul.f32 %v1080, %v1168
      %v1187 = vmul.f32 %v1081, %v1168
      %v1188 = vmul.f32 %v1082, %v1168
      %v1189 = vmul.f32 %v1083, %v1168
      %v1190 = vmul.f32 %v1084, %v1168
      %v1191 = vmul.f32 %v1085, %v1168
      %v1192 = vmul.f32 %v1086, %v1168
      %v1193 = vmul.f32 %v1087, %v1168
      %v1194 = vmul.f32 %v1088, %v1168
      %v1195 = vmul.f32 %v1089, %v1168
      %v1196 = vmul.f32 %v1090, %v1168
      %v1197 = vmul.f32 %v1091, %v1168
      %v1198 = vmul.f32 %v1092, %v1168
      %v1199 = vmul.f32 %v1093, %v1168
      %v1200 = vmul.f32 %v1094, %v1168
      %v1201 = vadd.f32 %v1133, %v1169
      %v1202 = vadd.f32 %v1134, %v1170
      %v1203 = vadd.f32 %v1135, %v1171
      %v1204 = vadd.f32 %v1136, %v1172
      %v1205 = vadd.f32 %v1137, %v1173
      %v1206 = vadd.f32 %v1138, %v1174
      %v1207 = vadd.f32 %v1139, %v1175
      %v1208 = vadd.f32 %v1140, %v1176
      %v1209 = vadd.f32 %v1141, %v1177
      %v1210 = vadd.f32 %v1142, %v1178
      %v1211 = vadd.f32 %v1143, %v1179
      %v1212 = vadd.f32 %v1144, %v1180
      %v1213 = vadd.f32 %v1145, %v1181
      %v1214 = vadd.f32 %v1146, %v1182
      %v1215 = vadd.f32 %v1147, %v1183
      %v1216 = vadd.f32 %v1148, %v1184
      %v1217 = vadd.f32 %v1149, %v1185
      %v1218 = vadd.f32 %v1150, %v1186
      %v1219 = vadd.f32 %v1151, %v1187
      %v1220 = vadd.f32 %v1152, %v1188
      %v1221 = vadd.f32 %v1153, %v1189
      %v1222 = vadd.f32 %v1154, %v1190
      %v1223 = vadd.f32 %v1155, %v1191
      %v1224 = vadd.f32 %v1156, %v1192
      %v1225 = vadd.f32 %v1157, %v1193
      %v1226 = vadd.f32 %v1158, %v1194
      %v1227 = vadd.f32 %v1159, %v1195
      %v1228 = vadd.f32 %v1160, %v1196
      %v1229 = vadd.f32 %v1161, %v1197
      %v1230 = vadd.f32 %v1162, %v1198
      %v1231 = vadd.f32 %v1163, %v1199
      %v1232 = vadd.f32 %v1164, %v1200
      %v1233 = vlaneseq
      %v1234 = vshrl.u32 %v1233, 7
      %v1235 = vsub.s32 7, %v1234
      %v1236 = vrot.slane %v851, %v1235
      %v1237 = vmul.f32 %v1065, %v1236
      %v1238 = vmul.f32 %v1066, %v1236
      %v1239 = vmul.f32 %v1067, %v1236
      %v1240 = vmul.f32 %v1068, %v1236
      %v1241 = vmul.f32 %v1069, %v1236
      %v1242 = vmul.f32 %v1070, %v1236
      %v1243 = vmul.f32 %v1071, %v1236
      %v1244 = vmul.f32 %v1072, %v1236
      %v1245 = vmul.f32 %v1073, %v1236
      %v1246 = vmul.f32 %v1074, %v1236
      %v1247 = vmul.f32 %v1075, %v1236
      %v1248 = vmul.f32 %v1076, %v1236
      %v1249 = vmul.f32 %v1077, %v1236
      %v1250 = vmul.f32 %v1078, %v1236
      %v1251 = vmul.f32 %v1079, %v1236
      %v1252 = vmul.f32 %v1080, %v1236
      %v1253 = vmul.f32 %v1081, %v1236
      %v1254 = vmul.f32 %v1082, %v1236
      %v1255 = vmul.f32 %v1083, %v1236
      %v1256 = vmul.f32 %v1084, %v1236
      %v1257 = vmul.f32 %v1085, %v1236
      %v1258 = vmul.f32 %v1086, %v1236
      %v1259 = vmul.f32 %v1087, %v1236
      %v1260 = vmul.f32 %v1088, %v1236
      %v1261 = vmul.f32 %v1089, %v1236
      %v1262 = vmul.f32 %v1090, %v1236
      %v1263 = vmul.f32 %v1091, %v1236
      %v1264 = vmul.f32 %v1092, %v1236
      %v1265 = vmul.f32 %v1093, %v1236
      %v1266 = vmul.f32 %v1094, %v1236
      %v1267 = vmul.f32 %v1095, %v1236
      %v1268 = vmul.f32 %v1096, %v1236
      %v1269 = vadd.f32 %v1201, %v1237
      %v1270 = vadd.f32 %v1202, %v1238
      %v1271 = vadd.f32 %v1203, %v1239
      %v1272 = vadd.f32 %v1204, %v1240
      %v1273 = vadd.f32 %v1205, %v1241
      %v1274 = vadd.f32 %v1206, %v1242
      %v1275 = vadd.f32 %v1207, %v1243
      %v1276 = vadd.f32 %v1208, %v1244
      %v1277 = vadd.f32 %v1209, %v1245
      %v1278 = vadd.f32 %v1210, %v1246
      %v1279 = vadd.f32 %v1211, %v1247
      %v1280 = vadd.f32 %v1212, %v1248
      %v1281 = vadd.f32 %v1213, %v1249
      %v1282 = vadd.f32 %v1214, %v1250
      %v1283 = vadd.f32 %v1215, %v1251
      %v1284 = vadd.f32 %v1216, %v1252
      %v1285 = vadd.f32 %v1217, %v1253
      %v1286 = vadd.f32 %v1218, %v1254
      %v1287 = vadd.f32 %v1219, %v1255
      %v1288 = vadd.f32 %v1220, %v1256
      %v1289 = vadd.f32 %v1221, %v1257
      %v1290 = vadd.f32 %v1222, %v1258
      %v1291 = vadd.f32 %v1223, %v1259
      %v1292 = vadd.f32 %v1224, %v1260
      %v1293 = vadd.f32 %v1225, %v1261
      %v1294 = vadd.f32 %v1226, %v1262
      %v1295 = vadd.f32 %v1227, %v1263
      %v1296 = vadd.f32 %v1228, %v1264
      %v1297 = vadd.f32 %v1229, %v1265
      %v1298 = vadd.f32 %v1230, %v1266
      %v1299 = vadd.f32 %v1231, %v1267
      %v1300 = vadd.f32 %v1232, %v1268
      %v1301 = vld [vmem:[#allocation2 + $0x2] sm:$0xff]
      %v1302 = vld [vmem:[#allocation2 + $0xa] sm:$0xff]
      %v1303 = vld [vmem:[#allocation2 + $0x1a] sm:$0xff]
      %v1304 = vld [vmem:[#allocation2 + $0x22] sm:$0xff]
      %v1305 = vld [vmem:[#allocation2 + $0x32] sm:$0xff]
      %v1306 = vld [vmem:[#allocation2 + $0x3a] sm:$0xff]
      %v1307 = vld [vmem:[#allocation2 + $0x4a] sm:$0xff]
      %v1308 = vld [vmem:[#allocation2 + $0x52] sm:$0xff]
      %v1309 = vld [vmem:[#allocation2 + $0x62] sm:$0xff]
      %v1310 = vld [vmem:[#allocation2 + $0x6a] sm:$0xff]
      %v1311 = vld [vmem:[#allocation2 + $0x7a] sm:$0xff]
      %v1312 = vld [vmem:[#allocation2 + $0x82] sm:$0xff]
      %v1313 = vld [vmem:[#allocation2 + $0x92] sm:$0xff]
      %v1314 = vld [vmem:[#allocation2 + $0x9a] sm:$0xff]
      %v1315 = vld [vmem:[#allocation2 + $0xaa] sm:$0xff]
      %v1316 = vld [vmem:[#allocation2 + $0xb2] sm:$0xff]
      %v1317 = vld [vmem:[#allocation2 + $0xc2] sm:$0xff]
      %v1318 = vld [vmem:[#allocation2 + $0xca] sm:$0xff]
      %v1319 = vld [vmem:[#allocation2 + $0xda] sm:$0xff]
      %v1320 = vld [vmem:[#allocation2 + $0xe2] sm:$0xff]
      %v1321 = vld [vmem:[#allocation2 + $0xf2] sm:$0xff]
      %v1322 = vld [vmem:[#allocation2 + $0xfa] sm:$0xff]
      %v1323 = vld [vmem:[#allocation2 + $0x10a] sm:$0xff]
      %v1324 = vld [vmem:[#allocation2 + $0x112] sm:$0xff]
      %v1325 = vld [vmem:[#allocation2 + $0x122] sm:$0xff]
      %v1326 = vld [vmem:[#allocation2 + $0x12a] sm:$0xff]
      %v1327 = vld [vmem:[#allocation2 + $0x13a] sm:$0xff]
      %v1328 = vld [vmem:[#allocation2 + $0x142] sm:$0xff]
      %v1329 = vld [vmem:[#allocation2 + $0x152] sm:$0xff]
      %v1330 = vld [vmem:[#allocation2 + $0x15a] sm:$0xff]
      %v1331 = vld [vmem:[#allocation2 + $0x16a] sm:$0xff]
      %v1332 = vld [vmem:[#allocation2 + $0x172] sm:$0xff]
      %v1333 = vld [vmem:[#allocation2 + $0x182] sm:$0xff]
      %v1334 = vld [vmem:[#allocation2 + $0x18a] sm:$0xff]
      %v1335 = vld [vmem:[#allocation2 + $0x19a] sm:$0xff]
      %v1336 = vld [vmem:[#allocation2 + $0x1a2] sm:$0xff]
      %v1337 = vlaneseq
      %v1338 = vshrl.u32 %v1337, 7
      %v1339 = vsub.s32 2, %v1338
      %v1340 = vrot.slane %v851, %v1339
      %v1341 = vmul.f32 %v1301, %v1340
      %v1342 = vmul.f32 %v1302, %v1340
      %v1343 = vmul.f32 %v1303, %v1340
      %v1344 = vmul.f32 %v1304, %v1340
      %v1345 = vmul.f32 %v1305, %v1340
      %v1346 = vmul.f32 %v1306, %v1340
      %v1347 = vmul.f32 %v1307, %v1340
      %v1348 = vmul.f32 %v1308, %v1340
      %v1349 = vmul.f32 %v1309, %v1340
      %v1350 = vmul.f32 %v1310, %v1340
      %v1351 = vmul.f32 %v1311, %v1340
      %v1352 = vmul.f32 %v1312, %v1340
      %v1353 = vmul.f32 %v1313, %v1340
      %v1354 = vmul.f32 %v1314, %v1340
      %v1355 = vmul.f32 %v1315, %v1340
      %v1356 = vmul.f32 %v1316, %v1340
      %v1357 = vmul.f32 %v1317, %v1340
      %v1358 = vmul.f32 %v1318, %v1340
      %v1359 = vmul.f32 %v1319, %v1340
      %v1360 = vmul.f32 %v1320, %v1340
      %v1361 = vmul.f32 %v1321, %v1340
      %v1362 = vmul.f32 %v1322, %v1340
      %v1363 = vmul.f32 %v1323, %v1340
      %v1364 = vmul.f32 %v1324, %v1340
      %v1365 = vmul.f32 %v1325, %v1340
      %v1366 = vmul.f32 %v1326, %v1340
      %v1367 = vmul.f32 %v1327, %v1340
      %v1368 = vmul.f32 %v1328, %v1340
      %v1369 = vmul.f32 %v1329, %v1340
      %v1370 = vmul.f32 %v1330, %v1340
      %v1371 = vmul.f32 %v1331, %v1340
      %v1372 = vmul.f32 %v1332, %v1340
      %v1373 = vadd.f32 %v1269, %v1341
      %v1374 = vadd.f32 %v1270, %v1342
      %v1375 = vadd.f32 %v1271, %v1343
      %v1376 = vadd.f32 %v1272, %v1344
      %v1377 = vadd.f32 %v1273, %v1345
      %v1378 = vadd.f32 %v1274, %v1346
      %v1379 = vadd.f32 %v1275, %v1347
      %v1380 = vadd.f32 %v1276, %v1348
      %v1381 = vadd.f32 %v1277, %v1349
      %v1382 = vadd.f32 %v1278, %v1350
      %v1383 = vadd.f32 %v1279, %v1351
      %v1384 = vadd.f32 %v1280, %v1352
      %v1385 = vadd.f32 %v1281, %v1353
      %v1386 = vadd.f32 %v1282, %v1354
      %v1387 = vadd.f32 %v1283, %v1355
      %v1388 = vadd.f32 %v1284, %v1356
      %v1389 = vadd.f32 %v1285, %v1357
      %v1390 = vadd.f32 %v1286, %v1358
      %v1391 = vadd.f32 %v1287, %v1359
      %v1392 = vadd.f32 %v1288, %v1360
      %v1393 = vadd.f32 %v1289, %v1361
      %v1394 = vadd.f32 %v1290, %v1362
      %v1395 = vadd.f32 %v1291, %v1363
      %v1396 = vadd.f32 %v1292, %v1364
      %v1397 = vadd.f32 %v1293, %v1365
      %v1398 = vadd.f32 %v1294, %v1366
      %v1399 = vadd.f32 %v1295, %v1367
      %v1400 = vadd.f32 %v1296, %v1368
      %v1401 = vadd.f32 %v1297, %v1369
      %v1402 = vadd.f32 %v1298, %v1370
      %v1403 = vadd.f32 %v1299, %v1371
      %v1404 = vadd.f32 %v1300, %v1372
      %v1405 = vlaneseq
      %v1406 = vshrl.u32 %v1405, 7
      %v1407 = vsub.s32 5, %v1406
      %v1408 = vrot.slane %v851, %v1407
      %v1409 = vmul.f32 %v1303, %v1408
      %v1410 = vmul.f32 %v1304, %v1408
      %v1411 = vmul.f32 %v1305, %v1408
      %v1412 = vmul.f32 %v1306, %v1408
      %v1413 = vmul.f32 %v1307, %v1408
      %v1414 = vmul.f32 %v1308, %v1408
      %v1415 = vmul.f32 %v1309, %v1408
      %v1416 = vmul.f32 %v1310, %v1408
      %v1417 = vmul.f32 %v1311, %v1408
      %v1418 = vmul.f32 %v1312, %v1408
      %v1419 = vmul.f32 %v1313, %v1408
      %v1420 = vmul.f32 %v1314, %v1408
      %v1421 = vmul.f32 %v1315, %v1408
      %v1422 = vmul.f32 %v1316, %v1408
      %v1423 = vmul.f32 %v1317, %v1408
      %v1424 = vmul.f32 %v1318, %v1408
      %v1425 = vmul.f32 %v1319, %v1408
      %v1426 = vmul.f32 %v1320, %v1408
      %v1427 = vmul.f32 %v1321, %v1408
      %v1428 = vmul.f32 %v1322, %v1408
      %v1429 = vmul.f32 %v1323, %v1408
      %v1430 = vmul.f32 %v1324, %v1408
      %v1431 = vmul.f32 %v1325, %v1408
      %v1432 = vmul.f32 %v1326, %v1408
      %v1433 = vmul.f32 %v1327, %v1408
      %v1434 = vmul.f32 %v1328, %v1408
      %v1435 = vmul.f32 %v1329, %v1408
      %v1436 = vmul.f32 %v1330, %v1408
      %v1437 = vmul.f32 %v1331, %v1408
      %v1438 = vmul.f32 %v1332, %v1408
      %v1439 = vmul.f32 %v1333, %v1408
      %v1440 = vmul.f32 %v1334, %v1408
      %v1441 = vadd.f32 %v1373, %v1409
      %v1442 = vadd.f32 %v1374, %v1410
      %v1443 = vadd.f32 %v1375, %v1411
      %v1444 = vadd.f32 %v1376, %v1412
      %v1445 = vadd.f32 %v1377, %v1413
      %v1446 = vadd.f32 %v1378, %v1414
      %v1447 = vadd.f32 %v1379, %v1415
      %v1448 = vadd.f32 %v1380, %v1416
      %v1449 = vadd.f32 %v1381, %v1417
      %v1450 = vadd.f32 %v1382, %v1418
      %v1451 = vadd.f32 %v1383, %v1419
      %v1452 = vadd.f32 %v1384, %v1420
      %v1453 = vadd.f32 %v1385, %v1421
      %v1454 = vadd.f32 %v1386, %v1422
      %v1455 = vadd.f32 %v1387, %v1423
      %v1456 = vadd.f32 %v1388, %v1424
      %v1457 = vadd.f32 %v1389, %v1425
      %v1458 = vadd.f32 %v1390, %v1426
      %v1459 = vadd.f32 %v1391, %v1427
      %v1460 = vadd.f32 %v1392, %v1428
      %v1461 = vadd.f32 %v1393, %v1429
      %v1462 = vadd.f32 %v1394, %v1430
      %v1463 = vadd.f32 %v1395, %v1431
      %v1464 = vadd.f32 %v1396, %v1432
      %v1465 = vadd.f32 %v1397, %v1433
      %v1466 = vadd.f32 %v1398, %v1434
      %v1467 = vadd.f32 %v1399, %v1435
      %v1468 = vadd.f32 %v1400, %v1436
      %v1469 = vadd.f32 %v1401, %v1437
      %v1470 = vadd.f32 %v1402, %v1438
      %v1471 = vadd.f32 %v1403, %v1439
      %v1472 = vadd.f32 %v1404, %v1440
      %v1473 = vlaneseq
      %v1474 = vshrl.u32 %v1473, 7
      %v1475 = vsub.s32 0, %v1474
      %v1476 = vrot.slane %v852, %v1475
      %v1477 = vmul.f32 %v1305, %v1476
      %v1478 = vmul.f32 %v1306, %v1476
      %v1479 = vmul.f32 %v1307, %v1476
      %v1480 = vmul.f32 %v1308, %v1476
      %v1481 = vmul.f32 %v1309, %v1476
      %v1482 = vmul.f32 %v1310, %v1476
      %v1483 = vmul.f32 %v1311, %v1476
      %v1484 = vmul.f32 %v1312, %v1476
      %v1485 = vmul.f32 %v1313, %v1476
      %v1486 = vmul.f32 %v1314, %v1476
      %v1487 = vmul.f32 %v1315, %v1476
      %v1488 = vmul.f32 %v1316, %v1476
      %v1489 = vmul.f32 %v1317, %v1476
      %v1490 = vmul.f32 %v1318, %v1476
      %v1491 = vmul.f32 %v1319, %v1476
      %v1492 = vmul.f32 %v1320, %v1476
      %v1493 = vmul.f32 %v1321, %v1476
      %v1494 = vmul.f32 %v1322, %v1476
      %v1495 = vmul.f32 %v1323, %v1476
      %v1496 = vmul.f32 %v1324, %v1476
      %v1497 = vmul.f32 %v1325, %v1476
      %v1498 = vmul.f32 %v1326, %v1476
      %v1499 = vmul.f32 %v1327, %v1476
      %v1500 = vmul.f32 %v1328, %v1476
      %v1501 = vmul.f32 %v1329, %v1476
      %v1502 = vmul.f32 %v1330, %v1476
      %v1503 = vmul.f32 %v1331, %v1476
      %v1504 = vmul.f32 %v1332, %v1476
      %v1505 = vmul.f32 %v1333, %v1476
      %v1506 = vmul.f32 %v1334, %v1476
      %v1507 = vmul.f32 %v1335, %v1476
      %v1508 = vmul.f32 %v1336, %v1476
      %v1509 = vadd.f32 %v1441, %v1477
      %v1510 = vadd.f32 %v1442, %v1478
      %v1511 = vadd.f32 %v1443, %v1479
      %v1512 = vadd.f32 %v1444, %v1480
      %v1513 = vadd.f32 %v1445, %v1481
      %v1514 = vadd.f32 %v1446, %v1482
      %v1515 = vadd.f32 %v1447, %v1483
      %v1516 = vadd.f32 %v1448, %v1484
      %v1517 = vadd.f32 %v1449, %v1485
      %v1518 = vadd.f32 %v1450, %v1486
      %v1519 = vadd.f32 %v1451, %v1487
      %v1520 = vadd.f32 %v1452, %v1488
      %v1521 = vadd.f32 %v1453, %v1489
      %v1522 = vadd.f32 %v1454, %v1490
      %v1523 = vadd.f32 %v1455, %v1491
      %v1524 = vadd.f32 %v1456, %v1492
      %v1525 = vadd.f32 %v1457, %v1493
      %v1526 = vadd.f32 %v1458, %v1494
      %v1527 = vadd.f32 %v1459, %v1495
      %v1528 = vadd.f32 %v1460, %v1496
      %v1529 = vadd.f32 %v1461, %v1497
      %v1530 = vadd.f32 %v1462, %v1498
      %v1531 = vadd.f32 %v1463, %v1499
      %v1532 = vadd.f32 %v1464, %v1500
      %v1533 = vadd.f32 %v1465, %v1501
      %v1534 = vadd.f32 %v1466, %v1502
      %v1535 = vadd.f32 %v1467, %v1503
      %v1536 = vadd.f32 %v1468, %v1504
      %v1537 = vadd.f32 %v1469, %v1505
      %v1538 = vadd.f32 %v1470, %v1506
      %v1539 = vadd.f32 %v1471, %v1507
      %v1540 = vadd.f32 %v1472, %v1508
      %v1541 = vld [vmem:[%s1 + $0xa] sm:$0x1]
      %v1542 = vlaneseq
      %v1543 = vshrl.u32 %v1542, 7
      %v1544 = vsub.s32 0, %v1543
      %v1545 = vrot.slane %v1541, %v1544
      %v1546 = vadd.f32 %v1509, %v1545
      %v1547 = vadd.f32 %v1510, %v1545
      %v1548 = vadd.f32 %v1511, %v1545
      %v1549 = vadd.f32 %v1512, %v1545
      %v1550 = vadd.f32 %v1513, %v1545
      %v1551 = vadd.f32 %v1514, %v1545
      %v1552 = vadd.f32 %v1515, %v1545
      %v1553 = vadd.f32 %v1516, %v1545
      %v1554 = vadd.f32 %v1517, %v1545
      %v1555 = vadd.f32 %v1518, %v1545
      %v1556 = vadd.f32 %v1519, %v1545
      %v1557 = vadd.f32 %v1520, %v1545
      %v1558 = vadd.f32 %v1521, %v1545
      %v1559 = vadd.f32 %v1522, %v1545
      %v1560 = vadd.f32 %v1523, %v1545
      %v1561 = vadd.f32 %v1524, %v1545
      %v1562 = vadd.f32 %v1525, %v1545
      %v1563 = vadd.f32 %v1526, %v1545
      %v1564 = vadd.f32 %v1527, %v1545
      %v1565 = vadd.f32 %v1528, %v1545
      %v1566 = vadd.f32 %v1529, %v1545
      %v1567 = vadd.f32 %v1530, %v1545
      %v1568 = vadd.f32 %v1531, %v1545
      %v1569 = vadd.f32 %v1532, %v1545
      %v1570 = vadd.f32 %v1533, %v1545
      %v1571 = vadd.f32 %v1534, %v1545
      %v1572 = vadd.f32 %v1535, %v1545
      %v1573 = vadd.f32 %v1536, %v1545
      %v1574 = vadd.f32 %v1537, %v1545
      %v1575 = vadd.f32 %v1538, %v1545
      %v1576 = vadd.f32 %v1539, %v1545
      %v1577 = vadd.f32 %v1540, %v1545
      %v1578 = vadd.f32 %v1546, 3.0
      %v1579 = vadd.f32 %v1547, 3.0
      %v1580 = vadd.f32 %v1548, 3.0
      %v1581 = vadd.f32 %v1549, 3.0
      %v1582 = vadd.f32 %v1550, 3.0
      %v1583 = vadd.f32 %v1551, 3.0
      %v1584 = vadd.f32 %v1552, 3.0
      %v1585 = vadd.f32 %v1553, 3.0
      %v1586 = vadd.f32 %v1554, 3.0
      %v1587 = vadd.f32 %v1555, 3.0
      %v1588 = vadd.f32 %v1556, 3.0
      %v1589 = vadd.f32 %v1557, 3.0
      %v1590 = vadd.f32 %v1558, 3.0
      %v1591 = vadd.f32 %v1559, 3.0
      %v1592 = vadd.f32 %v1560, 3.0
      %v1593 = vadd.f32 %v1561, 3.0
      %v1594 = vadd.f32 %v1562, 3.0
      %v1595 = vadd.f32 %v1563, 3.0
      %v1596 = vadd.f32 %v1564, 3.0
      %v1597 = vadd.f32 %v1565, 3.0
      %v1598 = vadd.f32 %v1566, 3.0
      %v1599 = vadd.f32 %v1567, 3.0
      %v1600 = vadd.f32 %v1568, 3.0
      %v1601 = vadd.f32 %v1569, 3.0
      %v1602 = vadd.f32 %v1570, 3.0
      %v1603 = vadd.f32 %v1571, 3.0
      %v1604 = vadd.f32 %v1572, 3.0
      %v1605 = vadd.f32 %v1573, 3.0
      %v1606 = vadd.f32 %v1574, 3.0
      %v1607 = vadd.f32 %v1575, 3.0
      %v1608 = vadd.f32 %v1576, 3.0
      %v1609 = vadd.f32 %v1577, 3.0
      %v1610 = vmax.f32 %v1578, 0.0
      %v1611 = vmax.f32 %v1579, 0.0
      %v1612 = vmax.f32 %v1580, 0.0
      %v1613 = vmax.f32 %v1581, 0.0
      %v1614 = vmax.f32 %v1582, 0.0
      %v1615 = vmax.f32 %v1583, 0.0
      %v1616 = vmax.f32 %v1584, 0.0
      %v1617 = vmax.f32 %v1585, 0.0
      %v1618 = vmax.f32 %v1586, 0.0
      %v1619 = vmax.f32 %v1587, 0.0
      %v1620 = vmax.f32 %v1588, 0.0
      %v1621 = vmax.f32 %v1589, 0.0
      %v1622 = vmax.f32 %v1590, 0.0
      %v1623 = vmax.f32 %v1591, 0.0
      %v1624 = vmax.f32 %v1592, 0.0
      %v1625 = vmax.f32 %v1593, 0.0
      %v1626 = vmax.f32 %v1594, 0.0
      %v1627 = vmax.f32 %v1595, 0.0
      %v1628 = vmax.f32 %v1596, 0.0
      %v1629 = vmax.f32 %v1597, 0.0
      %v1630 = vmax.f32 %v1598, 0.0
      %v1631 = vmax.f32 %v1599, 0.0
      %v1632 = vmax.f32 %v1600, 0.0
      %v1633 = vmax.f32 %v1601, 0.0
      %v1634 = vmax.f32 %v1602, 0.0
      %v1635 = vmax.f32 %v1603, 0.0
      %v1636 = vmax.f32 %v1604, 0.0
      %v1637 = vmax.f32 %v1605, 0.0
      %v1638 = vmax.f32 %v1606, 0.0
      %v1639 = vmax.f32 %v1607, 0.0
      %v1640 = vmax.f32 %v1608, 0.0
      %v1641 = vmax.f32 %v1609, 0.0
      %v1642 = vmin.f32 %v1610, 6.0
      %v1643 = vmin.f32 %v1611, 6.0
      %v1644 = vmin.f32 %v1612, 6.0
      %v1645 = vmin.f32 %v1613, 6.0
      %v1646 = vmin.f32 %v1614, 6.0
      %v1647 = vmin.f32 %v1615, 6.0
      %v1648 = vmin.f32 %v1616, 6.0
      %v1649 = vmin.f32 %v1617, 6.0
      %v1650 = vmin.f32 %v1618, 6.0
      %v1651 = vmin.f32 %v1619, 6.0
      %v1652 = vmin.f32 %v1620, 6.0
      %v1653 = vmin.f32 %v1621, 6.0
      %v1654 = vmin.f32 %v1622, 6.0
      %v1655 = vmin.f32 %v1623, 6.0
      %v1656 = vmin.f32 %v1624, 6.0
      %v1657 = vmin.f32 %v1625, 6.0
      %v1658 = vmin.f32 %v1626, 6.0
      %v1659 = vmin.f32 %v1627, 6.0
      %v1660 = vmin.f32 %v1628, 6.0
      %v1661 = vmin.f32 %v1629, 6.0
      %v1662 = vmin.f32 %v1630, 6.0
      %v1663 = vmin.f32 %v1631, 6.0
      %v1664 = vmin.f32 %v1632, 6.0
      %v1665 = vmin.f32 %v1633, 6.0
      %v1666 = vmin.f32 %v1634, 6.0
      %v1667 = vmin.f32 %v1635, 6.0
      %v1668 = vmin.f32 %v1636, 6.0
      %v1669 = vmin.f32 %v1637, 6.0
      %v1670 = vmin.f32 %v1638, 6.0
      %v1671 = vmin.f32 %v1639, 6.0
      %v1672 = vmin.f32 %v1640, 6.0
      %v1673 = vmin.f32 %v1641, 6.0
      %v1674 = vmul.f32 %v1642, 0.16666667
      %v1675 = vmul.f32 %v1643, 0.16666667
      %v1676 = vmul.f32 %v1644, 0.16666667
      %v1677 = vmul.f32 %v1645, 0.16666667
      %v1678 = vmul.f32 %v1646, 0.16666667
      %v1679 = vmul.f32 %v1647, 0.16666667
      %v1680 = vmul.f32 %v1648, 0.16666667
      %v1681 = vmul.f32 %v1649, 0.16666667
      %v1682 = vmul.f32 %v1650, 0.16666667
      %v1683 = vmul.f32 %v1651, 0.16666667
      %v1684 = vmul.f32 %v1652, 0.16666667
      %v1685 = vmul.f32 %v1653, 0.16666667
      %v1686 = vmul.f32 %v1654, 0.16666667
      %v1687 = vmul.f32 %v1655, 0.16666667
      %v1688 = vmul.f32 %v1656, 0.16666667
      %v1689 = vmul.f32 %v1657, 0.16666667
      %v1690 = vmul.f32 %v1658, 0.16666667
      %v1691 = vmul.f32 %v1659, 0.16666667
      %v1692 = vmul.f32 %v1660, 0.16666667
      %v1693 = vmul.f32 %v1661, 0.16666667
      %v1694 = vmul.f32 %v1662, 0.16666667
      %v1695 = vmul.f32 %v1663, 0.16666667
      %v1696 = vmul.f32 %v1664, 0.16666667
      %v1697 = vmul.f32 %v1665, 0.16666667
      %v1698 = vmul.f32 %v1666, 0.16666667
      %v1699 = vmul.f32 %v1667, 0.16666667
      %v1700 = vmul.f32 %v1668, 0.16666667
      %v1701 = vmul.f32 %v1669, 0.16666667
      %v1702 = vmul.f32 %v1670, 0.16666667
      %v1703 = vmul.f32 %v1671, 0.16666667
      %v1704 = vmul.f32 %v1672, 0.16666667
      %v1705 = vmul.f32 %v1673, 0.16666667
      %v1706 = vmul.f32 %v1546, %v1674
      %v1707 = vmul.f32 %v1547, %v1675
      %v1708 = vmul.f32 %v1548, %v1676
      %v1709 = vmul.f32 %v1549, %v1677
      %v1710 = vmul.f32 %v1550, %v1678
      %v1711 = vmul.f32 %v1551, %v1679
      %v1712 = vmul.f32 %v1552, %v1680
      %v1713 = vmul.f32 %v1553, %v1681
      %v1714 = vmul.f32 %v1554, %v1682
      %v1715 = vmul.f32 %v1555, %v1683
      %v1716 = vmul.f32 %v1556, %v1684
      %v1717 = vmul.f32 %v1557, %v1685
      %v1718 = vmul.f32 %v1558, %v1686
      %v1719 = vmul.f32 %v1559, %v1687
      %v1720 = vmul.f32 %v1560, %v1688
      %v1721 = vmul.f32 %v1561, %v1689
      %v1722 = vmul.f32 %v1562, %v1690
      %v1723 = vmul.f32 %v1563, %v1691
      %v1724 = vmul.f32 %v1564, %v1692
      %v1725 = vmul.f32 %v1565, %v1693
      %v1726 = vmul.f32 %v1566, %v1694
      %v1727 = vmul.f32 %v1567, %v1695
      %v1728 = vmul.f32 %v1568, %v1696
      %v1729 = vmul.f32 %v1569, %v1697
      %v1730 = vmul.f32 %v1570, %v1698
      %v1731 = vmul.f32 %v1571, %v1699
      %v1732 = vmul.f32 %v1572, %v1700
      %v1733 = vmul.f32 %v1573, %v1701
      %v1734 = vmul.f32 %v1574, %v1702
      %v1735 = vmul.f32 %v1575, %v1703
      %v1736 = vmul.f32 %v1576, %v1704
      %v1737 = vmul.f32 %v1577, %v1705
      %v1738 = vadd.f32 %v1706, %v1707
      %v1739 = vadd.f32 %v1738, %v1708
      %v1740 = vadd.f32 %v1739, %v1709
      %v1741 = vadd.f32 %v1740, %v1710
      %v1742 = vadd.f32 %v1741, %v1711
      %v1743 = vadd.f32 %v1742, %v1712
      %v1744 = vadd.f32 %v1743, %v1713
      %v1745 = vadd.f32 %v1744, %v1714
      %v1746 = vadd.f32 %v1745, %v1715
      %v1747 = vadd.f32 %v1746, %v1716
      %v1748 = vadd.f32 %v1747, %v1717
      %v1749 = vadd.f32 %v1748, %v1718
      %v1750 = vadd.f32 %v1749, %v1719
      %v1751 = vadd.f32 %v1750, %v1720
      %v1752 = vadd.f32 %v1751, %v1721
      %v1753 = vadd.f32 %v1752, %v1722
      %v1754 = vadd.f32 %v1753, %v1723
      %v1755 = vadd.f32 %v1754, %v1724
      %v1756 = vadd.f32 %v1755, %v1725
      %v1757 = vadd.f32 %v1756, %v1726
      %v1758 = vadd.f32 %v1757, %v1727
      %v1759 = vadd.f32 %v1758, %v1728
      %v1760 = vadd.f32 %v1759, %v1729
      %v1761 = vadd.f32 %v1760, %v1730
      %v1762 = vadd.f32 %v1761, %v1731
      %v1763 = vadd.f32 %v1762, %v1732
      %v1764 = vadd.f32 %v1763, %v1733
      %v1765 = vadd.f32 %v1764, %v1734
      %v1766 = vadd.f32 %v1765, %v1735
      %v1767 = vadd.f32 %v1766, %v1736
      %v1768 = vadd.f32 %v1767, %v1737
      %v1769 = vrot.slane %v1768, 4
      %v1770 = vadd.f32 %v1768, %v1769
      %v1771 = vrot.slane %v1770, 2
      %v1772 = vadd.f32 %v1770, %v1771
      %v1773 = vrot.slane %v1772, 1
      %v1774 = vadd.f32 %v1772, %v1773
      %v1775 = vmul.f32 %v1774, 0.00390625
      %v1776 = vld [vmem:[%s3] sm:$0xff]
      %v1777 = vld [vmem:[%s3 + $0x8] sm:$0xff]
      %v1778 = vld [vmem:[%s3 + $0x10] sm:$0xff]
      %v1779 = vld [vmem:[%s3 + $0x18] sm:$0xff]
      %v1780 = vld [vmem:[%s3 + $0x20] sm:$0xff]
      %v1781 = vld [vmem:[%s3 + $0x28] sm:$0xff]
      %v1782 = vld [vmem:[%s3 + $0x30] sm:$0xff]
      %v1783 = vld [vmem:[%s3 + $0x38] sm:$0xff]
      %v1784 = vld [vmem:[%s3 + $0x40] sm:$0xff]
      %v1785 = vld [vmem:[%s3 + $0x48] sm:$0xff]
      %v1786 = vld [vmem:[%s3 + $0x50] sm:$0xff]
      %v1787 = vld [vmem:[%s3 + $0x58] sm:$0xff]
      %v1788 = vld [vmem:[%s3 + $0x60] sm:$0xff]
      %v1789 = vld [vmem:[%s3 + $0x68] sm:$0xff]
      %v1790 = vld [vmem:[%s3 + $0x70] sm:$0xff]
      %v1791 = vld [vmem:[%s3 + $0x78] sm:$0xff]
      %v1792 = vld [vmem:[%s1 + $0xc] sm:$0x1]
      %1793 = vmatprep.subr.mxu0 0.0
      %1794 = vmatpush1.msra.mxu0 %v1776
      %1795 = vmatprep.subr.mxu0 0.0
      %1796 = vmatpush1.msra.mxu0 %v1777
      %1797 = vmatprep.subr.mxu0 0.0
      %1798 = vmatpush1.msra.mxu0 %v1778
      %1799 = vmatprep.subr.mxu0 0.0
      %1800 = vmatpush1.msra.mxu0 %v1779
      %1801 = vmatprep.subr.mxu0 0.0
      %1802 = vmatpush1.msra.mxu0 %v1780
      %1803 = vmatprep.subr.mxu0 0.0
      %1804 = vmatpush1.msra.mxu0 %v1781
      %1805 = vmatprep.subr.mxu0 0.0
      %1806 = vmatpush1.msra.mxu0 %v1782
      %1807 = vmatprep.subr.mxu0 0.0
      %1808 = vmatpush1.msra.mxu0 %v1783
      %1809 = vmatprep.subr.mxu0 0.0
      %1810 = vmatpush1.msra.mxu0 %v1784
      %1811 = vmatprep.subr.mxu0 0.0
      %1812 = vmatpush1.msra.mxu0 %v1785
      %1813 = vmatprep.subr.mxu0 0.0
      %1814 = vmatpush1.msra.mxu0 %v1786
      %1815 = vmatprep.subr.mxu0 0.0
      %1816 = vmatpush1.msra.mxu0 %v1787
      %1817 = vmatprep.subr.mxu0 0.0
      %1818 = vmatpush1.msra.mxu0 %v1788
      %1819 = vmatprep.subr.mxu0 0.0
      %1820 = vmatpush1.msra.mxu0 %v1789
      %1821 = vmatprep.subr.mxu0 0.0
      %1822 = vmatpush1.msra.mxu0 %v1790
      %1823 = vmatprep.subr.mxu0 0.0
      %1824 = vmatpush1.msra.mxu0 %v1791
      %1825 = vmatprep.subr.mxu0 0.0
      %1826 = vmatpush1.msra.mxu0 0.0
      %1827 = vmatprep.subr.mxu0 0.0
      %1828 = vmatpush1.msra.mxu0 0.0
      %1829 = vmatprep.subr.mxu0 0.0
      %1830 = vmatpush1.msra.mxu0 0.0
      %1831 = vmatprep.subr.mxu0 0.0
      %1832 = vmatpush1.msra.mxu0 0.0
      %1833 = vmatprep.subr.mxu0 0.0
      %1834 = vmatpush1.msra.mxu0 0.0
      %1835 = vmatprep.subr.mxu0 0.0
      %1836 = vmatpush1.msra.mxu0 0.0
      %1837 = vmatprep.subr.mxu0 0.0
      %1838 = vmatpush1.msra.mxu0 0.0
      %1839 = vmatprep.subr.mxu0 0.0
      %1840 = vmatpush1.msra.mxu0 0.0
      %1841 = vmatprep.subr.mxu0 0.0
      %1842 = vmatpush1.msra.mxu0 0.0
      %1843 = vmatprep.subr.mxu0 0.0
      %1844 = vmatpush1.msra.mxu0 0.0
      %1845 = vmatprep.subr.mxu0 0.0
      %1846 = vmatpush1.msra.mxu0 0.0
      %1847 = vmatprep.subr.mxu0 0.0
      %1848 = vmatpush1.msra.mxu0 0.0
      %1849 = vmatprep.subr.mxu0 0.0
      %1850 = vmatpush1.msra.mxu0 0.0
      %1851 = vmatprep.subr.mxu0 0.0
      %1852 = vmatpush1.msra.mxu0 0.0
      %1853 = vmatprep.subr.mxu0 0.0
      %1854 = vmatpush1.msra.mxu0 0.0
      %1855 = vmatprep.subr.mxu0 0.0
      %1856 = vmatpush1.msra.mxu0 0.0
      %1857 = vmatprep.mubr.f32.mxu0 0.0
      %1858 = vmatmul.mubr.f32.gmra.mrb[0].mxu0 %v1775
      %v1859 = vpop.f32.mrb[0].mxu0
      %v1860 = vadd.f32 %v1792, %v1859
      %v1861 = vpop.f32.mrb[0].mxu0
      %1862 = vdwg.mxu0
      %v1863 = vmax.f32 %v1860, 0.0
      %v1864 = vld [vmem:[%s4] sm:$0xff]
      %v1865 = vld [vmem:[%s4 + $0x8] sm:$0xff]
      %v1866 = vld [vmem:[%s4 + $0x10] sm:$0xff]
      %v1867 = vld [vmem:[%s4 + $0x18] sm:$0xff]
      %v1868 = vld [vmem:[%s1 + $0xb] sm:$0x1]
      %vm1869 = vcmask 261120
      %v1871 = vsel %vm1869, %v1863, 0
      %1873 = vmatprep.subr.mxu0 0.0
      %1874 = vmatpush1.msra.mxu0 %v1864
      %1875 = vmatprep.subr.mxu0 0.0
      %1876 = vmatpush1.msra.mxu0 %v1865
      %1877 = vmatprep.subr.mxu0 0.0
      %1878 = vmatpush1.msra.mxu0 %v1866
      %1879 = vmatprep.subr.mxu0 0.0
      %1880 = vmatpush1.msra.mxu0 %v1867
      %1881 = vmatprep.subr.mxu0 0.0
      %1882 = vmatpush1.msra.mxu0 0.0
      %1883 = vmatprep.subr.mxu0 0.0
      %1884 = vmatpush1.msra.mxu0 0.0
      %1885 = vmatprep.subr.mxu0 0.0
      %1886 = vmatpush1.msra.mxu0 0.0
      %1887 = vmatprep.subr.mxu0 0.0
      %1888 = vmatpush1.msra.mxu0 0.0
      %1889 = vmatprep.subr.mxu0 0.0
      %1890 = vmatpush1.msra.mxu0 0.0
      %1891 = vmatprep.subr.mxu0 0.0
      %1892 = vmatpush1.msra.mxu0 0.0
      %1893 = vmatprep.subr.mxu0 0.0
      %1894 = vmatpush1.msra.mxu0 0.0
      %1895 = vmatprep.subr.mxu0 0.0
      %1896 = vmatpush1.msra.mxu0 0.0
      %1897 = vmatprep.subr.mxu0 0.0
      %1898 = vmatpush1.msra.mxu0 0.0
      %1899 = vmatprep.subr.mxu0 0.0
      %1900 = vmatpush1.msra.mxu0 0.0
      %1901 = vmatprep.subr.mxu0 0.0
      %1902 = vmatpush1.msra.mxu0 0.0
      %1903 = vmatprep.subr.mxu0 0.0
      %1904 = vmatpush1.msra.mxu0 0.0
      %1905 = vmatprep.subr.mxu0 0.0
      %1906 = vmatpush1.msra.mxu0 0.0
      %1907 = vmatprep.subr.mxu0 0.0
      %1908 = vmatpush1.msra.mxu0 0.0
      %1909 = vmatprep.subr.mxu0 0.0
      %1910 = vmatpush1.msra.mxu0 0.0
      %1911 = vmatprep.subr.mxu0 0.0
      %1912 = vmatpush1.msra.mxu0 0.0
      %1913 = vmatprep.subr.mxu0 0.0
      %1914 = vmatpush1.msra.mxu0 0.0
      %1915 = vmatprep.subr.mxu0 0.0
      %1916 = vmatpush1.msra.mxu0 0.0
      %1917 = vmatprep.subr.mxu0 0.0
      %1918 = vmatpush1.msra.mxu0 0.0
      %1919 = vmatprep.subr.mxu0 0.0
      %1920 = vmatpush1.msra.mxu0 0.0
      %1921 = vmatprep.subr.mxu0 0.0
      %1922 = vmatpush1.msra.mxu0 0.0
      %1923 = vmatprep.subr.mxu0 0.0
      %1924 = vmatpush1.msra.mxu0 0.0
      %1925 = vmatprep.subr.mxu0 0.0
      %1926 = vmatpush1.msra.mxu0 0.0
      %1927 = vmatprep.subr.mxu0 0.0
      %1928 = vmatpush1.msra.mxu0 0.0
      %1929 = vmatprep.subr.mxu0 0.0
      %1930 = vmatpush1.msra.mxu0 0.0
      %1931 = vmatprep.subr.mxu0 0.0
      %1932 = vmatpush1.msra.mxu0 0.0
      %1933 = vmatprep.subr.mxu0 0.0
      %1934 = vmatpush1.msra.mxu0 0.0
      %1935 = vmatprep.subr.mxu0 0.0
      %1936 = vmatpush1.msra.mxu0 0.0
      %1937 = vmatprep.mubr.f32.mxu0 0.0
      %1938 = vmatmul.mubr.f32.gmra.mrb[0].mxu0 %v1871
      %v1939 = vpop.f32.mrb[0].mxu0
      %v1940 = vadd.f32 %v1868, %v1939
      %v1941 = vpop.f32.mrb[0].mxu0
      %1942 = vdwg.mxu0
      %v1943 = vadd.f32 %v1940, 3.0
      %v1944 = vmax.f32 %v1943, 0.0
      %v1945 = vmin.f32 %v1944, 6.0
      %v1946 = vmul.f32 %v1945, 0.16666667
      %v1947 = vlaneseq
      %v1948 = vshrl.u32 %v1947, 7
      %v1949 = vsub.s32 0, %v1948
      %v1950 = vrot.slane %v1946, %v1949
      %v1951 = vmul.f32 %v1706, %v1950
      %v1952 = vmul.f32 %v1707, %v1950
      %v1953 = vmul.f32 %v1708, %v1950
      %v1954 = vmul.f32 %v1709, %v1950
      %v1955 = vmul.f32 %v1710, %v1950
      %v1956 = vmul.f32 %v1711, %v1950
      %v1957 = vmul.f32 %v1712, %v1950
      %v1958 = vmul.f32 %v1713, %v1950
      %v1959 = vmul.f32 %v1714, %v1950
      %v1960 = vmul.f32 %v1715, %v1950
      %v1961 = vmul.f32 %v1716, %v1950
      %v1962 = vmul.f32 %v1717, %v1950
      %v1963 = vmul.f32 %v1718, %v1950
      %v1964 = vmul.f32 %v1719, %v1950
      %v1965 = vmul.f32 %v1720, %v1950
      %v1966 = vmul.f32 %v1721, %v1950
      %v1967 = vmul.f32 %v1722, %v1950
      %v1968 = vmul.f32 %v1723, %v1950
      %v1969 = vmul.f32 %v1724, %v1950
      %v1970 = vmul.f32 %v1725, %v1950
      %v1971 = vmul.f32 %v1726, %v1950
      %v1972 = vmul.f32 %v1727, %v1950
      %v1973 = vmul.f32 %v1728, %v1950
      %v1974 = vmul.f32 %v1729, %v1950
      %v1975 = vmul.f32 %v1730, %v1950
      %v1976 = vmul.f32 %v1731, %v1950
      %v1977 = vmul.f32 %v1732, %v1950
      %v1978 = vmul.f32 %v1733, %v1950
      %v1979 = vmul.f32 %v1734, %v1950
      %v1980 = vmul.f32 %v1735, %v1950
      %v1981 = vmul.f32 %v1736, %v1950
      %v1982 = vmul.f32 %v1737, %v1950
      %v1983 = vld [vmem:[%s5] sm:$0xff]
      %v1984 = vld [vmem:[%s5 + $0x8] sm:$0xff]
      %v1985 = vld [vmem:[%s5 + $0x10] sm:$0xff]
      %v1986 = vld [vmem:[%s5 + $0x18] sm:$0xff]
      %v1987 = vld [vmem:[%s5 + $0x20] sm:$0xff]
      %v1988 = vld [vmem:[%s5 + $0x28] sm:$0xff]
      %v1989 = vld [vmem:[%s5 + $0x30] sm:$0xff]
      %v1990 = vld [vmem:[%s5 + $0x38] sm:$0xff]
      %v1991 = vld [vmem:[%s5 + $0x40] sm:$0xff]
      %v1992 = vld [vmem:[%s5 + $0x48] sm:$0xff]
      %v1993 = vld [vmem:[%s5 + $0x50] sm:$0xff]
      %v1994 = vld [vmem:[%s5 + $0x58] sm:$0xff]
      %v1995 = vld [vmem:[%s5 + $0x60] sm:$0xff]
      %v1996 = vld [vmem:[%s5 + $0x68] sm:$0xff]
      %v1997 = vld [vmem:[%s5 + $0x70] sm:$0xff]
      %v1998 = vld [vmem:[%s5 + $0x78] sm:$0xff]
      %v1999 = vld [vmem:[%s1 + $0xd] sm:$0x1]
      %v2000 = vlaneseq
      %v2001 = vshrl.u32 %v2000, 7
      %v2002 = vsub.s32 0, %v2001
      %v2003 = vrot.slane %v1999, %v2002
      %2004 = vmatprep.subr.mxu0 0.0
      %2005 = vmatpush1.msra.mxu0 %v1983
      %2006 = vmatprep.subr.mxu0 0.0
      %2007 = vmatpush1.msra.mxu0 %v1984
      %2008 = vmatprep.subr.mxu0 0.0
      %2009 = vmatpush1.msra.mxu0 %v1985
      %2010 = vmatprep.subr.mxu0 0.0
      %2011 = vmatpush1.msra.mxu0 %v1986
      %2012 = vmatprep.subr.mxu0 0.0
      %2013 = vmatpush1.msra.mxu0 %v1987
      %2014 = vmatprep.subr.mxu0 0.0
      %2015 = vmatpush1.msra.mxu0 %v1988
      %2016 = vmatprep.subr.mxu0 0.0
      %2017 = vmatpush1.msra.mxu0 %v1989
      %2018 = vmatprep.subr.mxu0 0.0
      %2019 = vmatpush1.msra.mxu0 %v1990
      %2020 = vmatprep.subr.mxu0 0.0
      %2021 = vmatpush1.msra.mxu0 %v1991
      %2022 = vmatprep.subr.mxu0 0.0
      %2023 = vmatpush1.msra.mxu0 %v1992
      %2024 = vmatprep.subr.mxu0 0.0
      %2025 = vmatpush1.msra.mxu0 %v1993
      %2026 = vmatprep.subr.mxu0 0.0
      %2027 = vmatpush1.msra.mxu0 %v1994
      %2028 = vmatprep.subr.mxu0 0.0
      %2029 = vmatpush1.msra.mxu0 %v1995
      %2030 = vmatprep.subr.mxu0 0.0
      %2031 = vmatpush1.msra.mxu0 %v1996
      %2032 = vmatprep.subr.mxu0 0.0
      %2033 = vmatpush1.msra.mxu0 %v1997
      %2034 = vmatprep.subr.mxu0 0.0
      %2035 = vmatpush1.msra.mxu0 %v1998
      %2036 = vmatprep.subr.mxu0 0.0
      %2037 = vmatpush1.msra.mxu0 0.0
      %2038 = vmatprep.subr.mxu0 0.0
      %2039 = vmatpush1.msra.mxu0 0.0
      %2040 = vmatprep.subr.mxu0 0.0
      %2041 = vmatpush1.msra.mxu0 0.0
      %2042 = vmatprep.subr.mxu0 0.0
      %2043 = vmatpush1.msra.mxu0 0.0
      %2044 = vmatprep.subr.mxu0 0.0
      %2045 = vmatpush1.msra.mxu0 0.0
      %2046 = vmatprep.subr.mxu0 0.0
      %2047 = vmatpush1.msra.mxu0 0.0
      %2048 = vmatprep.subr.mxu0 0.0
      %2049 = vmatpush1.msra.mxu0 0.0
      %2050 = vmatprep.subr.mxu0 0.0
      %2051 = vmatpush1.msra.mxu0 0.0
      %2052 = vmatprep.subr.mxu0 0.0
      %2053 = vmatpush1.msra.mxu0 0.0
      %2054 = vmatprep.subr.mxu0 0.0
      %2055 = vmatpush1.msra.mxu0 0.0
      %2056 = vmatprep.subr.mxu0 0.0
      %2057 = vmatpush1.msra.mxu0 0.0
      %2058 = vmatprep.subr.mxu0 0.0
      %2059 = vmatpush1.msra.mxu0 0.0
      %2060 = vmatprep.subr.mxu0 0.0
      %2061 = vmatpush1.msra.mxu0 0.0
      %2062 = vmatprep.subr.mxu0 0.0
      %2063 = vmatpush1.msra.mxu0 0.0
      %2064 = vmatprep.subr.mxu0 0.0
      %2065 = vmatpush1.msra.mxu0 0.0
      %2066 = vmatprep.subr.mxu0 0.0
      %2067 = vmatpush1.msra.mxu0 0.0
      %2068 = vmatprep.mubr.f32.mxu0 0.0
      %2069 = vmatmul.mubr.f32.gmra.mrb[0].mxu0 %v1951
      %v2070 = vpop.f32.mrb[0].mxu0
      %v2071 = vadd.f32 %v2003, %v2070
      %v2072 = vpop.f32.mrb[0].mxu0
      %2073 = vmatprep.mubr.f32.mxu0 0.0
      %2074 = vmatmul.mubr.f32.gmra.mrb[0].mxu0 %v1952
      %v2075 = vpop.f32.mrb[0].mxu0
      %v2076 = vadd.f32 %v2003, %v2075
      %v2077 = vpop.f32.mrb[0].mxu0
      %2078 = vmatprep.mubr.f32.mxu0 0.0
      %2079 = vmatmul.mubr.f32.gmra.mrb[0].mxu0 %v1953
      %v2080 = vpop.f32.mrb[0].mxu0
      %v2081 = vadd.f32 %v2003, %v2080
      %v2082 = vpop.f32.mrb[0].mxu0
      %2083 = vmatprep.mubr.f32.mxu0 0.0
      %2084 = vmatmul.mubr.f32.gmra.mrb[0].mxu0 %v1954
      %v2085 = vpop.f32.mrb[0].mxu0
      %v2086 = vadd.f32 %v2003, %v2085
      %v2087 = vpop.f32.mrb[0].mxu0
      %2088 = vmatprep.mubr.f32.mxu0 0.0
      %2089 = vmatmul.mubr.f32.gmra.mrb[0].mxu0 %v1955
      %v2090 = vpop.f32.mrb[0].mxu0
      %v2091 = vadd.f32 %v2003, %v2090
      %v2092 = vpop.f32.mrb[0].mxu0
      %2093 = vmatprep.mubr.f32.mxu0 0.0
      %2094 = vmatmul.mubr.f32.gmra.mrb[0].mxu0 %v1956
      %v2095 = vpop.f32.mrb[0].mxu0
      %v2096 = vadd.f32 %v2003, %v2095
      %v2097 = vpop.f32.mrb[0].mxu0
      %2098 = vmatprep.mubr.f32.mxu0 0.0
      %2099 = vmatmul.mubr.f32.gmra.mrb[0].mxu0 %v1957
      %v2100 = vpop.f32.mrb[0].mxu0
      %v2101 = vadd.f32 %v2003, %v2100
      %v2102 = vpop.f32.mrb[0].mxu0
      %2103 = vmatprep.mubr.f32.mxu0 0.0
      %2104 = vmatmul.mubr.f32.gmra.mrb[0].mxu0 %v1958
      %v2105 = vpop.f32.mrb[0].mxu0
      %v2106 = vadd.f32 %v2003, %v2105
      %v2107 = vpop.f32.mrb[0].mxu0
      %2108 = vmatprep.mubr.f32.mxu0 0.0
      %2109 = vmatmul.mubr.f32.gmra.mrb[0].mxu0 %v1959
      %v2110 = vpop.f32.mrb[0].mxu0
      %v2111 = vadd.f32 %v2003, %v2110
      %v2112 = vpop.f32.mrb[0].mxu0
      %2113 = vmatprep.mubr.f32.mxu0 0.0
      %2114 = vmatmul.mubr.f32.gmra.mrb[0].mxu0 %v1960
      %v2115 = vpop.f32.mrb[0].mxu0
      %v2116 = vadd.f32 %v2003, %v2115
      %v2117 = vpop.f32.mrb[0].mxu0
      %2118 = vmatprep.mubr.f32.mxu0 0.0
      %2119 = vmatmul.mubr.f32.gmra.mrb[0].mxu0 %v1961
      %v2120 = vpop.f32.mrb[0].mxu0
      %v2121 = vadd.f32 %v2003, %v2120
      %v2122 = vpop.f32.mrb[0].mxu0
      %2123 = vmatprep.mubr.f32.mxu0 0.0
      %2124 = vmatmul.mubr.f32.gmra.mrb[0].mxu0 %v1962
      %v2125 = vpop.f32.mrb[0].mxu0
      %v2126 = vadd.f32 %v2003, %v2125
      %v2127 = vpop.f32.mrb[0].mxu0
      %2128 = vmatprep.mubr.f32.mxu0 0.0
      %2129 = vmatmul.mubr.f32.gmra.mrb[0].mxu0 %v1963
      %v2130 = vpop.f32.mrb[0].mxu0
      %v2131 = vadd.f32 %v2003, %v2130
      %v2132 = vpop.f32.mrb[0].mxu0
      %2133 = vmatprep.mubr.f32.mxu0 0.0
      %2134 = vmatmul.mubr.f32.gmra.mrb[0].mxu0 %v1964
      %v2135 = vpop.f32.mrb[0].mxu0
      %v2136 = vadd.f32 %v2003, %v2135
      %v2137 = vpop.f32.mrb[0].mxu0
      %2138 = vmatprep.mubr.f32.mxu0 0.0
      %2139 = vmatmul.mubr.f32.gmra.mrb[0].mxu0 %v1965
      %v2140 = vpop.f32.mrb[0].mxu0
      %v2141 = vadd.f32 %v2003, %v2140
      %v2142 = vpop.f32.mrb[0].mxu0
      %2143 = vmatprep.mubr.f32.mxu0 0.0
      %2144 = vmatmul.mubr.f32.gmra.mrb[0].mxu0 %v1966
      %v2145 = vpop.f32.mrb[0].mxu0
      %v2146 = vadd.f32 %v2003, %v2145
      %v2147 = vpop.f32.mrb[0].mxu0
      %2148 = vmatprep.mubr.f32.mxu0 0.0
      %2149 = vmatmul.mubr.f32.gmra.mrb[0].mxu0 %v1967
      %v2150 = vpop.f32.mrb[0].mxu0
      %v2151 = vadd.f32 %v2003, %v2150
      %v2152 = vpop.f32.mrb[0].mxu0
      %2153 = vmatprep.mubr.f32.mxu0 0.0
      %2154 = vmatmul.mubr.f32.gmra.mrb[0].mxu0 %v1968
      %v2155 = vpop.f32.mrb[0].mxu0
      %v2156 = vadd.f32 %v2003, %v2155
      %v2157 = vpop.f32.mrb[0].mxu0
      %2158 = vmatprep.mubr.f32.mxu0 0.0
      %2159 = vmatmul.mubr.f32.gmra.mrb[0].mxu0 %v1969
      %v2160 = vpop.f32.mrb[0].mxu0
      %v2161 = vadd.f32 %v2003, %v2160
      %v2162 = vpop.f32.mrb[0].mxu0
      %2163 = vmatprep.mubr.f32.mxu0 0.0
      %2164 = vmatmul.mubr.f32.gmra.mrb[0].mxu0 %v1970
      %v2165 = vpop.f32.mrb[0].mxu0
      %v2166 = vadd.f32 %v2003, %v2165
      %v2167 = vpop.f32.mrb[0].mxu0
      %2168 = vmatprep.mubr.f32.mxu0 0.0
      %2169 = vmatmul.mubr.f32.gmra.mrb[0].mxu0 %v1971
      %v2170 = vpop.f32.mrb[0].mxu0
      %v2171 = vadd.f32 %v2003, %v2170
      %v2172 = vpop.f32.mrb[0].mxu0
      %2173 = vmatprep.mubr.f32.mxu0 0.0
      %2174 = vmatmul.mubr.f32.gmra.mrb[0].mxu0 %v1972
      %v2175 = vpop.f32.mrb[0].mxu0
      %v2176 = vadd.f32 %v2003, %v2175
      %v2177 = vpop.f32.mrb[0].mxu0
      %2178 = vmatprep.mubr.f32.mxu0 0.0
      %2179 = vmatmul.mubr.f32.gmra.mrb[0].mxu0 %v1973
      %v2180 = vpop.f32.mrb[0].mxu0
      %v2181 = vadd.f32 %v2003, %v2180
      %v2182 = vpop.f32.mrb[0].mxu0
      %2183 = vmatprep.mubr.f32.mxu0 0.0
      %2184 = vmatmul.mubr.f32.gmra.mrb[0].mxu0 %v1974
      %v2185 = vpop.f32.mrb[0].mxu0
      %v2186 = vadd.f32 %v2003, %v2185
      %v2187 = vpop.f32.mrb[0].mxu0
      %2188 = vmatprep.mubr.f32.mxu0 0.0
      %2189 = vmatmul.mubr.f32.gmra.mrb[0].mxu0 %v1975
      %v2190 = vpop.f32.mrb[0].mxu0
      %v2191 = vadd.f32 %v2003, %v2190
      %v2192 = vpop.f32.mrb[0].mxu0
      %2193 = vmatprep.mubr.f32.mxu0 0.0
      %2194 = vmatmul.mubr.f32.gmra.mrb[0].mxu0 %v1976
      %v2195 = vpop.f32.mrb[0].mxu0
      %v2196 = vadd.f32 %v2003, %v2195
      %v2197 = vpop.f32.mrb[0].mxu0
      %2198 = vmatprep.mubr.f32.mxu0 0.0
      %2199 = vmatmul.mubr.f32.gmra.mrb[0].mxu0 %v1977
      %v2200 = vpop.f32.mrb[0].mxu0
      %v2201 = vadd.f32 %v2003, %v2200
      %v2202 = vpop.f32.mrb[0].mxu0
      %2203 = vmatprep.mubr.f32.mxu0 0.0
      %2204 = vmatmul.mubr.f32.gmra.mrb[0].mxu0 %v1978
      %v2205 = vpop.f32.mrb[0].mxu0
      %v2206 = vadd.f32 %v2003, %v2205
      %v2207 = vpop.f32.mrb[0].mxu0
      %2208 = vmatprep.mubr.f32.mxu0 0.0
      %2209 = vmatmul.mubr.f32.gmra.mrb[0].mxu0 %v1979
      %v2210 = vpop.f32.mrb[0].mxu0
      %v2211 = vadd.f32 %v2003, %v2210
      %v2212 = vpop.f32.mrb[0].mxu0
      %2213 = vmatprep.mubr.f32.mxu0 0.0
      %2214 = vmatmul.mubr.f32.gmra.mrb[0].mxu0 %v1980
      %v2215 = vpop.f32.mrb[0].mxu0
      %v2216 = vadd.f32 %v2003, %v2215
      %v2217 = vpop.f32.mrb[0].mxu0
      %2218 = vmatprep.mubr.f32.mxu0 0.0
      %2219 = vmatmul.mubr.f32.gmra.mrb[0].mxu0 %v1981
      %v2220 = vpop.f32.mrb[0].mxu0
      %v2221 = vadd.f32 %v2003, %v2220
      %v2222 = vpop.f32.mrb[0].mxu0
      %2223 = vmatprep.mubr.f32.mxu0 0.0
      %2224 = vmatmul.mubr.f32.gmra.mrb[0].mxu0 %v1982
      %v2225 = vpop.f32.mrb[0].mxu0
      %v2226 = vadd.f32 %v2003, %v2225
      %v2227 = vpop.f32.mrb[0].mxu0
      %2228 = vdwg.mxu0
      %v2229 = vld [vmem:[%s246] sm:$0xff]
      %v2230 = vld [vmem:[%s246 + $0x8] sm:$0xff]
      %v2231 = vld [vmem:[%s246 + $0x10] sm:$0xff]
      %v2232 = vld [vmem:[%s246 + $0x18] sm:$0xff]
      %v2233 = vld [vmem:[%s246 + $0x20] sm:$0xff]
      %v2234 = vld [vmem:[%s246 + $0x28] sm:$0xff]
      %v2235 = vld [vmem:[%s246 + $0x30] sm:$0xff]
      %v2236 = vld [vmem:[%s246 + $0x38] sm:$0xff]
      %v2237 = vld [vmem:[%s246 + $0x40] sm:$0xff]
      %v2238 = vld [vmem:[%s246 + $0x48] sm:$0xff]
      %v2239 = vld [vmem:[%s246 + $0x50] sm:$0xff]
      %v2240 = vld [vmem:[%s246 + $0x58] sm:$0xff]
      %v2241 = vld [vmem:[%s246 + $0x60] sm:$0xff]
      %v2242 = vld [vmem:[%s246 + $0x68] sm:$0xff]
      %v2243 = vld [vmem:[%s246 + $0x70] sm:$0xff]
      %v2244 = vld [vmem:[%s246 + $0x78] sm:$0xff]
      %v2245 = vld [vmem:[%s246 + $0x80] sm:$0xff]
      %v2246 = vld [vmem:[%s246 + $0x88] sm:$0xff]
      %v2247 = vld [vmem:[%s246 + $0x90] sm:$0xff]
      %v2248 = vld [vmem:[%s246 + $0x98] sm:$0xff]
      %v2249 = vld [vmem:[%s246 + $0xa0] sm:$0xff]
      %v2250 = vld [vmem:[%s246 + $0xa8] sm:$0xff]
      %v2251 = vld [vmem:[%s246 + $0xb0] sm:$0xff]
      %v2252 = vld [vmem:[%s246 + $0xb8] sm:$0xff]
      %v2253 = vld [vmem:[%s246 + $0xc0] sm:$0xff]
      %v2254 = vld [vmem:[%s246 + $0xc8] sm:$0xff]
      %v2255 = vld [vmem:[%s246 + $0xd0] sm:$0xff]
      %v2256 = vld [vmem:[%s246 + $0xd8] sm:$0xff]
      %v2257 = vld [vmem:[%s246 + $0xe0] sm:$0xff]
      %v2258 = vld [vmem:[%s246 + $0xe8] sm:$0xff]
      %v2259 = vld [vmem:[%s246 + $0xf0] sm:$0xff]
      %v2260 = vld [vmem:[%s246 + $0xf8] sm:$0xff]
      %v2261 = vadd.f32 %v2071, %v2229
      %v2262 = vadd.f32 %v2076, %v2230
      %v2263 = vadd.f32 %v2081, %v2231
      %v2264 = vadd.f32 %v2086, %v2232
      %v2265 = vadd.f32 %v2091, %v2233
      %v2266 = vadd.f32 %v2096, %v2234
      %v2267 = vadd.f32 %v2101, %v2235
      %v2268 = vadd.f32 %v2106, %v2236
      %v2269 = vadd.f32 %v2111, %v2237
      %v2270 = vadd.f32 %v2116, %v2238
      %v2271 = vadd.f32 %v2121, %v2239
      %v2272 = vadd.f32 %v2126, %v2240
      %v2273 = vadd.f32 %v2131, %v2241
      %v2274 = vadd.f32 %v2136, %v2242
      %v2275 = vadd.f32 %v2141, %v2243
      %v2276 = vadd.f32 %v2146, %v2244
      %v2277 = vadd.f32 %v2151, %v2245
      %v2278 = vadd.f32 %v2156, %v2246
      %v2279 = vadd.f32 %v2161, %v2247
      %v2280 = vadd.f32 %v2166, %v2248
      %v2281 = vadd.f32 %v2171, %v2249
      %v2282 = vadd.f32 %v2176, %v2250
      %v2283 = vadd.f32 %v2181, %v2251
      %v2284 = vadd.f32 %v2186, %v2252
      %v2285 = vadd.f32 %v2191, %v2253
      %v2286 = vadd.f32 %v2196, %v2254
      %v2287 = vadd.f32 %v2201, %v2255
      %v2288 = vadd.f32 %v2206, %v2256
      %v2289 = vadd.f32 %v2211, %v2257
      %v2290 = vadd.f32 %v2216, %v2258
      %v2291 = vadd.f32 %v2221, %v2259
      %v2292 = vadd.f32 %v2226, %v2260
      %2293 = vst.msk [vmem:[%s251] sm:$0xff] %vm297, %v2261
      %2294 = vst.msk [vmem:[%s251 + $0x8] sm:$0xff] %vm297, %v2262
      %2295 = vst.msk [vmem:[%s251 + $0x10] sm:$0xff] %vm297, %v2263
      %2296 = vst.msk [vmem:[%s251 + $0x18] sm:$0xff] %vm297, %v2264
      %2297 = vst.msk [vmem:[%s251 + $0x20] sm:$0xff] %vm297, %v2265
      %2298 = vst.msk [vmem:[%s251 + $0x28] sm:$0xff] %vm297, %v2266
      %2299 = vst.msk [vmem:[%s251 + $0x30] sm:$0xff] %vm297, %v2267
      %2300 = vst.msk [vmem:[%s251 + $0x38] sm:$0xff] %vm297, %v2268
      %2301 = vst.msk [vmem:[%s251 + $0x40] sm:$0xff] %vm297, %v2269
      %2302 = vst.msk [vmem:[%s251 + $0x48] sm:$0xff] %vm297, %v2270
      %2303 = vst.msk [vmem:[%s251 + $0x50] sm:$0xff] %vm297, %v2271
      %2304 = vst.msk [vmem:[%s251 + $0x58] sm:$0xff] %vm297, %v2272
      %2305 = vst.msk [vmem:[%s251 + $0x60] sm:$0xff] %vm297, %v2273
      %2306 = vst.msk [vmem:[%s251 + $0x68] sm:$0xff] %vm297, %v2274
      %2307 = vst.msk [vmem:[%s251 + $0x70] sm:$0xff] %vm297, %v2275
      %2308 = vst.msk [vmem:[%s251 + $0x78] sm:$0xff] %vm297, %v2276
      %2309 = vst.msk [vmem:[%s251 + $0x80] sm:$0xff] %vm297, %v2277
      %2310 = vst.msk [vmem:[%s251 + $0x88] sm:$0xff] %vm297, %v2278
      %2311 = vst.msk [vmem:[%s251 + $0x90] sm:$0xff] %vm297, %v2279
      %2312 = vst.msk [vmem:[%s251 + $0x98] sm:$0xff] %vm297, %v2280
      %2313 = vst.msk [vmem:[%s251 + $0xa0] sm:$0xff] %vm297, %v2281
      %2314 = vst.msk [vmem:[%s251 + $0xa8] sm:$0xff] %vm297, %v2282
      %2315 = vst.msk [vmem:[%s251 + $0xb0] sm:$0xff] %vm297, %v2283
      %2316 = vst.msk [vmem:[%s251 + $0xb8] sm:$0xff] %vm297, %v2284
      %2317 = vst.msk [vmem:[%s251 + $0xc0] sm:$0xff] %vm297, %v2285
      %2318 = vst.msk [vmem:[%s251 + $0xc8] sm:$0xff] %vm297, %v2286
      %2319 = vst.msk [vmem:[%s251 + $0xd0] sm:$0xff] %vm297, %v2287
      %2320 = vst.msk [vmem:[%s251 + $0xd8] sm:$0xff] %vm297, %v2288
      %2321 = vst.msk [vmem:[%s251 + $0xe0] sm:$0xff] %vm297, %v2289
      %2322 = vst.msk [vmem:[%s251 + $0xe8] sm:$0xff] %vm297, %v2290
      %2323 = vst.msk [vmem:[%s251 + $0xf0] sm:$0xff] %vm297, %v2291
      %2324 = vst.msk [vmem:[%s251 + $0xf8] sm:$0xff] %vm297, %v2292
      %p2325 = scmp.lt.s32.totalorder %s17, 1
      %s2326 = scalar_select %p2325, %s17, 1
      %s2327 = smul.addr %s2326, 32
      %s2328 = smul.addr %s2327, 8
      %s2329 = scalar_lea.vmem %s6, %s2328
      // Predicated region
      $region45: #{inverted_residual_forward.1} parent=43 // pred_check
        %p2330 = pneg %p166
      $region46: #{inverted_residual_forward.1} parent=43 // pred_check_branch
        %2332 = sbr.rel (%p2330) target = $region48
      $region47: #{inverted_residual_forward.1} parent=43 // pred_region
        _
      $region48: #{inverted_residual_forward.1} parent=43 // pred_fallthru
        _
    $region44: #{inverted_residual_forward.1} parent=5 // pred_fallthru
      _
    %p2333 = scmp.le.s32.totalorder 2, %s12
    // Predicated region
    $region49: #{inverted_residual_forward.1} parent=5 // pred_check
      %p2334 = pneg %p2333
    $region50: #{inverted_residual_forward.1} parent=5 // pred_check_branch
      %2336 = sbr.rel (%p2334) target = $region52
    $region51: #{inverted_residual_forward.1} parent=5 // pred_region
      %s2337 = ssub.s32 %s12, 2
      // Predicated region
      $region53: #{inverted_residual_forward.1} parent=51 // pred_check
        %p2338 = pneg %p172
      $region54: #{inverted_residual_forward.1} parent=51 // pred_check_branch
        %2340 = sbr.rel (%p2338) target = $region56
      $region55: #{inverted_residual_forward.1} parent=51 // pred_region
        %p2341 = scmp.lt.s32.totalorder %s18, 1
        %s2342 = scalar_select %p2341, %s18, 1
        %s2343 = smul.addr %s2342, 32
        %s2344 = smul.addr %s2343, 8
        %s2345 = scalar_lea.vmem %s6, %s2344
      $region56: #{inverted_residual_forward.1} parent=51 // pred_fallthru
        _
    $region52: #{inverted_residual_forward.1} parent=5 // pred_fallthru
      _
  $region6: #{inverted_residual_forward.1} parent=0 // loop_footer
    %s16 = sadd.s32 1, %s12
  $region7: #{inverted_residual_forward.1} parent=0 // loop_footer_branch
    %11 = sbr.rel target = $region3
  $region8: #{inverted_residual_forward.1} parent=0 // loop_exit
    _

</llo_original>
